<compile_context>
chip_gen: v6e
topology: v6e:2x2x1
jax: 0.10.0
libtpu: 0.0.40
codegen_flags: <defaults>
</compile_context>

<pallas_src>
import jax
import jax.numpy as jnp
import numpy as np
from jax.experimental import pallas as pl
from jax.experimental.pallas import tpu as pltpu

DIM = 32                          # self.dim
DIM_SCALE = 4                     # self.dim_scale
GROUPS = DIM_SCALE ** 2           # 16 LayerNorm groups per input pixel
GROUPS_P1 = DIM_SCALE             # 4 groups (p2 values) inside one p1 chunk
EXPAND = GROUPS * DIM             # 512 (linear output width)
LANE_W = GROUPS_P1 * DIM          # 128: one p1 chunk == one full lane vector
EPS = 1e-5                        # nn.LayerNorm default eps


def _expand_norm_shuffle_kernel(x_ref, wc_ref, gvar_ref, gscale_ref, beta_ref,
                                o_ref):
    # One grid step = (row-tile i, shuffle index p1).
    # x_ref:      (R, W, DIM)          input pixels (shared across the 4 p1 steps)
    # wc_ref:     (DIM, LANE_W)        this p1's slice of the pre-centered weight
    # gvar_ref:   (LANE_W, GROUPS_P1)  group indicator / DIM  (variance via MXU)
    # gscale_ref: (GROUPS_P1, LANE_W)  indicator^T with gamma folded in
    # beta_ref:   (1, LANE_W)          beta tiled across the 4 p2 groups
    # o_ref:      (R, 1, W, LANE_W)    output block, already in final memory order
    R, W, C = x_ref.shape
    x = x_ref[...].reshape(R * W, C)

    # Expand on the MXU; result is already mean-subtracted per LN group
    # (group means of y = x @ W are linear in x, folded into the weight).
    yc = jnp.dot(x, wc_ref[...], preferred_element_type=jnp.float32)

    # Per-group variance (E[yc^2]) and gamma-folded rstd broadcast-back, both
    # as tiny MXU matmuls -> no narrow cross-lane reductions, no masked stores.
    var = jnp.dot(yc * yc, gvar_ref[...], preferred_element_type=jnp.float32)
    scale = jnp.dot(jax.lax.rsqrt(var + EPS), gscale_ref[...],
                    preferred_element_type=jnp.float32)
    out = yc * scale + beta_ref[...]                               # (R*W, 128)

    # Full-width, unmasked, lane-dense store in final (b,d,h*4+p1,w*4+p2,c) order.
    o_ref[...] = out.reshape(R, 1, W, LANE_W).astype(o_ref.dtype)


def _pick_row_tile(bdh, w, rows_target=1024):
    """(rows per outer grid step, number of outer grid steps)."""
    # ~rows_target matmul rows per step; keep >=2 outer steps when possible so
    # the v7x megacore load-balances (the p1 axis already adds 4 inner steps
    # per outer step for DMA/compute overlap).
    cap = bdh if bdh < 2 else max(1, bdh // 2)
    r = max(1, min(cap, rows_target // max(w, 1)))
    # Prefer an exact divisor of bdh close to the target (avoids padding).
    for cand in range(r, max(1, (3 * r) // 4) - 1, -1):
        if bdh % cand == 0:
            return cand, bdh // cand
    # No nearby divisor: keep the tile size and pad a few rows in the wrapper.
    return r, -(-bdh // r)


def final_patch_expand_x4_3d(x, w_expand, gamma, beta, *,
                             rows_target=1024,
                             compute_dtype=jnp.bfloat16,
                             out_dtype=jnp.bfloat16):
    """x: (B, D, H, W, DIM) -> (B, D, 4H, 4W, DIM) in `out_dtype`."""
    B, D, H, W, C = x.shape
    assert C == DIM
    BDH = B * D * H

    # Fold the per-group mean subtraction into the bias-free weight (exact).
    wg = w_expand.reshape(DIM, GROUPS, DIM)
    w_centered = (wg - wg.mean(axis=-1, keepdims=True)).reshape(DIM, EXPAND)
    w_centered = w_centered.astype(compute_dtype)

    # Constant matrices for per-p1 MXU-based group statistics (identical for
    # every p1: lanes within a 128-wide chunk are ordered (p2, c)).
    group_id = np.arange(LANE_W) // DIM                               # (128,)
    onehot = (group_id[:, None] == np.arange(GROUPS_P1)[None, :]).astype(np.float32)
    gvar = jnp.asarray(onehot / DIM)                                  # (128, 4)
    gscale = jnp.asarray(onehot.T) * jnp.tile(gamma, GROUPS_P1)[None, :]  # (4, 128)
    beta128 = jnp.tile(beta, GROUPS_P1).reshape(1, LANE_W)            # (1, 128)

    r_rows, n_row_tiles = _pick_row_tile(BDH, W, rows_target)
    bdh_pad = r_rows * n_row_tiles

    x3 = x.reshape(BDH, W, DIM).astype(compute_dtype)
    if bdh_pad != BDH:
        # Padded rows produce finite garbage (beta) and are sliced off below.
        x3 = jnp.pad(x3, ((0, bdh_pad - BDH), (0, 0), (0, 0)))

    N = bdh_pad * W
    in_bytes = jnp.dtype(compute_dtype).itemsize
    out_bytes = jnp.dtype(out_dtype).itemsize
    cost = pl.CostEstimate(
        flops=2 * N * DIM * EXPAND + 4 * N * EXPAND * GROUPS_P1,
        transcendentals=N * GROUPS,
        bytes_accessed=(N * DIM * in_bytes            # x
                        + N * EXPAND * out_bytes      # output dominates
                        + DIM * EXPAND * in_bytes
                        + (2 * LANE_W * GROUPS_P1 + LANE_W) * 4),
    )

    y4 = pl.pallas_call(
        _expand_norm_shuffle_kernel,
        out_shape=jax.ShapeDtypeStruct((bdh_pad, DIM_SCALE, W, LANE_W), out_dtype),
        grid_spec=pltpu.PrefetchScalarGridSpec(
            num_scalar_prefetch=0,
            grid=(n_row_tiles, DIM_SCALE),            # p1 innermost: x reused
            in_specs=[
                pl.BlockSpec((r_rows, W, DIM), lambda i, p1: (i, 0, 0)),     # x
                pl.BlockSpec((DIM, LANE_W), lambda i, p1: (0, p1)),          # weight slice
                pl.BlockSpec((LANE_W, GROUPS_P1), lambda i, p1: (0, 0)),     # var mat
                pl.BlockSpec((GROUPS_P1, LANE_W), lambda i, p1: (0, 0)),     # scale mat
                pl.BlockSpec((1, LANE_W), lambda i, p1: (0, 0)),             # beta
            ],
            # NOTE: add pipeline_mode=pl.Buffered(3) here only if a profile
            # shows exposed output writeback DMA.
            out_specs=pl.BlockSpec((r_rows, 1, W, LANE_W),
                                   lambda i, p1: (i, p1, 0, 0)),
        ),
        compiler_params=pltpu.CompilerParams(
            dimension_semantics=("parallel", "arbitrary"),
            vmem_limit_bytes=32 << 20,   # headroom for v7x (64 MiB physical)
        ),
        cost_estimate=cost,
    )(x3, w_centered, gvar, gscale, beta128)

    if bdh_pad != BDH:
        y4 = y4[:BDH]
    # (BDH, 4, W, 128) -> (B, D, 4H, 4W, 32) is a pure contiguous reshape:
    # the kernel already wrote the pixel-shuffled memory order.
    return y4.reshape(B, D, H * DIM_SCALE, W * DIM_SCALE, DIM)


def _reference(x, w_expand, gamma, beta):
    B, D, H, W, _ = x.shape
    y = x @ w_expand                                          # expand (no bias)
    y = y.reshape(B, D, H, W, DIM_SCALE, DIM_SCALE, DIM)
    y = y.transpose(0, 1, 2, 4, 3, 5, 6)
    y = y.reshape(B, D, H * DIM_SCALE, W * DIM_SCALE, DIM)
    mean = y.mean(-1, keepdims=True)
    var = ((y - mean) ** 2).mean(-1, keepdims=True)
    return (y - mean) / jnp.sqrt(var + EPS) * gamma + beta


if __name__ == "__main__":
    key = jax.random.PRNGKey(0)
    k1, k2, k3, k4 = jax.random.split(key, 4)

    B, D, H, W = 2, 2, 16, 16
    x = jax.random.normal(k1, (B, D, H, W, DIM), dtype=jnp.float32)

    # nn.Linear(dim, 16*dim, bias=False): PyTorch weight is (16*dim, dim); we
    # store it pre-transposed as (dim, 16*dim) so y = x @ W^T == x @ w_expand.
    w_expand = jax.random.normal(k2, (DIM, EXPAND), dtype=jnp.float32) / jnp.sqrt(DIM)
    gamma = 1.0 + 0.1 * jax.random.normal(k3, (DIM,), dtype=jnp.float32)
    beta = 0.1 * jax.random.normal(k4, (DIM,), dtype=jnp.float32)

    ref = _reference(x, w_expand, gamma, beta)

    # 1) f32 path: exact rewrite of the PyTorch module (tight tolerance).
    out_f32 = jax.block_until_ready(
        final_patch_expand_x4_3d(x, w_expand, gamma, beta,
                                 compute_dtype=jnp.float32,
                                 out_dtype=jnp.float32))
    assert out_f32.shape == (B, D, H * DIM_SCALE, W * DIM_SCALE, DIM)
    np.testing.assert_allclose(np.asarray(out_f32), np.asarray(ref),
                               atol=1e-4, rtol=1e-4)

    # 2) default perf path: bf16 matmul inputs + bf16 output (f32 accumulation);
    #    halves the dominant HBM write stream.  Looser tolerance per review.
    out_bf16 = jax.block_until_ready(
        final_patch_expand_x4_3d(x, w_expand, gamma, beta))
    assert out_bf16.shape == (B, D, H * DIM_SCALE, W * DIM_SCALE, DIM)
    assert out_bf16.dtype == jnp.bfloat16
    np.testing.assert_allclose(np.asarray(out_bf16).astype(np.float32),
                               np.asarray(ref), atol=5e-2, rtol=5e-2)

    print("KERNEL_OK")
</pallas_src>

<mosaic_0001>
module attributes {stable_mosaic.version = 11 : i64} {
  func.func @_expand_norm_shuffle_kernel(%arg0: i32, %arg1: i32, %arg2: memref<32x16x32xf32, #tpu.memory_space<vmem>>, %arg3: memref<32x128xf32, #tpu.memory_space<vmem>>, %arg4: memref<128x4xf32, #tpu.memory_space<vmem>>, %arg5: memref<4x128xf32, #tpu.memory_space<vmem>>, %arg6: memref<1x128xf32, #tpu.memory_space<vmem>>, %arg7: memref<32x1x16x128xf32, #tpu.memory_space<vmem>>) attributes {dimension_semantics = [#tpu.dimension_semantics<parallel>, #tpu.dimension_semantics<arbitrary>], iteration_bounds = array<i64: 2, 4>, scalar_prefetch = 0 : i64, scratch_operands = 0 : i64, tpu.core_type = #tpu.core_type<tc>, window_params = [{transform_indices = @transform_0, window_bounds = array<i64: 32, 16, 32>}, {transform_indices = @transform_1, window_bounds = array<i64: 32, 128>}, {pipeline_mode = #tpu.pipeline_mode<synchronous>, transform_indices = @transform_2, window_bounds = array<i64: 128, 4>}, {pipeline_mode = #tpu.pipeline_mode<synchronous>, transform_indices = @transform_3, window_bounds = array<i64: 4, 128>}, {pipeline_mode = #tpu.pipeline_mode<synchronous>, transform_indices = @transform_4, window_bounds = array<i64: 1, 128>}, {transform_indices = @transform_5, window_bounds = array<i64: 32, 1, 16, 128>}]} {
    %c0 = arith.constant 0 : index
    %c0_0 = arith.constant 0 : index
    %c0_1 = arith.constant 0 : index
    %0 = vector.load %arg2[%c0, %c0_0, %c0_1] : memref<32x16x32xf32, #tpu.memory_space<vmem>>, vector<32x16x32xf32>
    %1 = vector.shape_cast %0 : vector<32x16x32xf32> to vector<512x32xf32>
    %c0_2 = arith.constant 0 : index
    %c0_3 = arith.constant 0 : index
    %2 = vector.load %arg3[%c0_2, %c0_3] : memref<32x128xf32, #tpu.memory_space<vmem>>, vector<32x128xf32>
    %cst = arith.constant dense<0.000000e+00> : vector<512x128xf32>
    %3 = tpu.matmul %1, %2, %cst {dimension_numbers = #tpu.dot_dimension_numbers<[1], [0], [0], [1], [0, 0, 1, 1], [], []>} : vector<512x32xf32>, vector<32x128xf32>, vector<512x128xf32> -> vector<512x128xf32>
    %4 = arith.mulf %3, %3 : vector<512x128xf32>
    %c0_4 = arith.constant 0 : index
    %c0_5 = arith.constant 0 : index
    %5 = vector.load %arg4[%c0_4, %c0_5] : memref<128x4xf32, #tpu.memory_space<vmem>>, vector<128x4xf32>
    %cst_6 = arith.constant dense<0.000000e+00> : vector<512x4xf32>
    %6 = tpu.matmul %4, %5, %cst_6 {dimension_numbers = #tpu.dot_dimension_numbers<[1], [0], [0], [1], [0, 0, 1, 1], [], []>} : vector<512x128xf32>, vector<128x4xf32>, vector<512x4xf32> -> vector<512x4xf32>
    %cst_7 = arith.constant 9.99999974E-6 : f32
    %7 = vector.broadcast %cst_7 : f32 to vector<512x4xf32>
    %8 = arith.addf %6, %7 : vector<512x4xf32>
    %9 = math.rsqrt %8 : vector<512x4xf32>
    %c0_8 = arith.constant 0 : index
    %c0_9 = arith.constant 0 : index
    %10 = vector.load %arg5[%c0_8, %c0_9] : memref<4x128xf32, #tpu.memory_space<vmem>>, vector<4x128xf32>
    %cst_10 = arith.constant dense<0.000000e+00> : vector<512x128xf32>
    %11 = tpu.matmul %9, %10, %cst_10 {dimension_numbers = #tpu.dot_dimension_numbers<[1], [0], [0], [1], [0, 0, 1, 1], [], []>} : vector<512x4xf32>, vector<4x128xf32>, vector<512x128xf32> -> vector<512x128xf32>
    %12 = arith.mulf %3, %11 : vector<512x128xf32>
    %c0_11 = arith.constant 0 : index
    %c0_12 = arith.constant 0 : index
    %13 = vector.load %arg6[%c0_11, %c0_12] : memref<1x128xf32, #tpu.memory_space<vmem>>, vector<1x128xf32>
    %14 = vector.broadcast %13 : vector<1x128xf32> to vector<512x128xf32>
    %15 = arith.addf %12, %14 : vector<512x128xf32>
    %16 = vector.shape_cast %15 : vector<512x128xf32> to vector<32x1x16x128xf32>
    %c0_13 = arith.constant 0 : index
    %c0_14 = arith.constant 0 : index
    %c0_15 = arith.constant 0 : index
    %c0_16 = arith.constant 0 : index
    %17 = vector.load %arg7[%c0_13, %c0_14, %c0_15, %c0_16] : memref<32x1x16x128xf32, #tpu.memory_space<vmem>>, vector<32x1x16x128xf32>
    tpu.vector_store %arg7[%c0_13, %c0_14, %c0_15, %c0_16], %16 {strides = array<i32>} : memref<32x1x16x128xf32, #tpu.memory_space<vmem>>, vector<32x1x16x128xf32>,
    return
  }
  func.func @transform_0(%arg0: i32, %arg1: i32) -> (i32, i32, i32) {
    %c0_i32 = arith.constant 0 : i32
    %c0_i32_0 = arith.constant 0 : i32
    %c0_i32_1 = arith.constant 0 : i32
    return %arg0, %c0_i32, %c0_i32_0 : i32, i32, i32
  }
  func.func @transform_1(%arg0: i32, %arg1: i32) -> (i32, i32) {
    %c0_i32 = arith.constant 0 : i32
    %c0_i32_0 = arith.constant 0 : i32
    return %c0_i32, %arg1 : i32, i32
  }
  func.func @transform_2(%arg0: i32, %arg1: i32) -> (i32, i32) {
    %c0_i32 = arith.constant 0 : i32
    %c0_i32_0 = arith.constant 0 : i32
    %c0_i32_1 = arith.constant 0 : i32
    return %c0_i32, %c0_i32_0 : i32, i32
  }
  func.func @transform_3(%arg0: i32, %arg1: i32) -> (i32, i32) {
    %c0_i32 = arith.constant 0 : i32
    %c0_i32_0 = arith.constant 0 : i32
    %c0_i32_1 = arith.constant 0 : i32
    return %c0_i32, %c0_i32_0 : i32, i32
  }
  func.func @transform_4(%arg0: i32, %arg1: i32) -> (i32, i32) {
    %c0_i32 = arith.constant 0 : i32
    %c0_i32_0 = arith.constant 0 : i32
    %c0_i32_1 = arith.constant 0 : i32
    return %c0_i32, %c0_i32_0 : i32, i32
  }
  func.func @transform_5(%arg0: i32, %arg1: i32) -> (i32, i32, i32, i32) {
    %c0_i32 = arith.constant 0 : i32
    %c0_i32_0 = arith.constant 0 : i32
    %c0_i32_1 = arith.constant 0 : i32
    return %arg0, %arg1, %c0_i32, %c0_i32_0 : i32, i32, i32, i32
  }
}

</mosaic_0001>

<llo_original>
// kernel: tpu_custom_call.1
$region0: #{tpu_custom_call.1}
  #allocation0 [shape = 'u32[]', space=smem, size = 0x4, offset = 0x4, fixed_abs, tag = 'smem constant byte address 0x4 - core index']
  #allocation1 [shape = 'u32[144,128]{1,0:T(1,128)}', space=vmem, size = 0x12000, scoped, tag = 'internal scratch']
  #allocation9 [shape = 's32[]', space=sflag, size = 0x4, offset = 0, fixed_abs, tag = 'sflag constant byte address 0x0 - dummy sync flag']
  %s0 = inlined_call_operand.vmem [shape: f32[64,16,32], index: 0, kind: input, shape index: {}]
  %s1 = inlined_call_operand.hbm [shape: f32[32,512], index: 1, kind: input, shape index: {}]
  %s2 = inlined_call_operand.vmem [shape: f32[128,4], index: 2, kind: input, shape index: {}]
  %s3 = inlined_call_operand.hbm [shape: f32[4,128], index: 3, kind: input, shape index: {}]
  %s4 = inlined_call_operand.hbm [shape: f32[1,128], index: 4, kind: input, shape index: {}]
  %s5 = inlined_call_operand.hbm [shape: f32[64,4,16,128], index: 5, kind: output, shape index: {}]
  %s6 = sld [smem:[#allocation0]]
  $region65: #{tpu_custom_call.1} parent=0
    _
  %s8 = ssub.s32 1, %s6
  %s9 = scalar_select 0, %s8, %s6
  $region1: #{tpu_custom_call.1} parent=0
    #allocation2 [shape = 'u8[32768]{0}', space=vmem, size = 0x8000, scoped, tag = 'input window, operand 1']
    #allocation3 [shape = 's32[2]{0}', space=sflag, size = 0x8, scoped, tag = 'scoped memory for tpu_custom_call.1']
    #allocation4 [shape = 's32[2]{0}', space=sflag, size = 0x8, scoped, tag = 'scoped memory for tpu_custom_call.1']
    #allocation5 [shape = 'u8[2048]{0}', space=vmem, size = 0x800, scoped, tag = 'input window, operand 3, single buffered']
    #allocation6 [shape = 's32[1]{0}', space=sflag, size = 0x4, scoped, tag = 'scoped memory for tpu_custom_call.1']
    #allocation7 [shape = 'u8[512]{0}', space=vmem, size = 0x400, scoped, tag = 'input window, operand 4, single buffered']
    #allocation8 [shape = 'u8[524288]{0}', space=vmem, size = 0x80000, scoped, tag = 'output window, operand 0']
    %10 = vsyncpa [#allocation3], 0
    %s11 = scalar_lea.sflag [#allocation3], 1
    %12 = vsyncpa %s11, 0
    %13 = vsyncpa [#allocation6], 0
    %14 = vsyncpa [#allocation4], 0
    %s15 = scalar_lea.sflag [#allocation4], 1
    %16 = vsyncpa %s15, 0
    loop: start=0, step=1, limit=10
    $region2: #{tpu_custom_call.1} parent=1 // loop_pre_header
      _
    $region3: #{tpu_custom_call.1} parent=1 // loop_header
      %s18 = sphi 0, %s22
      %p19 = scmp.ge.s32.totalorder %s18, 10
      %s25 = sphi 0, %s37
      %s26 = sphi 0, %s33
      %s27 = sphi 0, %s25
      %s28 = sphi 0, %s26
      %s29 = sphi 0, %s27
      %s30 = sphi 0, %s28
      %s40 = sphi 0, %s42
      %s43 = sphi 0, %s40
      %s44 = sphi 0, %s43
      %s60 = sphi 0, %s44
      %s66 = sphi 0, %s68
      %s69 = sphi 0, %s66
      %s70 = sphi 0, %s69
      %s86 = sphi 0, %s70
      %s90 = sphi 0, %s90
      %s92 = sphi 0, %s90
      %s93 = sphi 0, %s92
      %s107 = sphi 0, %s93
      %s111 = sphi 0, %s111
      %s113 = sphi 0, %s111
      %s114 = sphi 0, %s113
      %s128 = sphi 0, %s114
      %s132 = sphi 0, %s132
      %s134 = sphi 0, %s132
      %s135 = sphi 0, %s134
      %s149 = sphi 0, %s135
      %s157 = sphi 0, %s159
      %s160 = sphi 0, %s157
      %s161 = sphi 0, %s160
      %s177 = sphi 0, %s161
    $region4: #{tpu_custom_call.1} parent=1 // loop_header_branch
      %21 = sbr.rel (%p19) target = $region8
    $region5: #{tpu_custom_call.1} parent=1 // loop_body
      %s23 = ssub.s32 %s18, 1
      %s24 = ssub.s32 %s18, 2
      %s31 = sadd.s32 1, %s26
      %p32 = scmp.ge.s32.totalorder %s31, 4
      %s33 = scalar_select %p32, 0, %s31
      %s34 = sadd.s32 1, %s25
      %s35 = scalar_select %p32, %s34, %s25
      %p36 = scmp.ge.s32.totalorder %s35, 2
      %s37 = scalar_select %p36, 0, %s35
      %s38 = ssub.s32 %s25, %s37
      %p39 = scmp.eq.s32.totalorder %s38, 0
      %s41 = sadd.s32 %s40, 1
      %s42 = scalar_select %p39, %s40, %s41
      %p45 = pneg %p39
      %p46 = scmp.eq.s32.totalorder %s18, 7
      %p47 = por %p45, %p46
      %p48 = scmp.ne.s32.totalorder %s40, %s43
      %p49 = scmp.eq.s32.totalorder %s18, 0
      %p50 = por %p48, %p49
      %p51 = scmp.ne.s32.totalorder %s40, %s43
      %p52 = scmp.eq.s32.totalorder %s23, 7
      %p53 = por %p51, %p52
      %p54 = scmp.ne.s32.totalorder %s43, %s44
      %p55 = scmp.eq.s32.totalorder %s23, 0
      %p56 = por %p54, %p55
      %p57 = scmp.ne.s32.totalorder %s43, %s44
      %p58 = scmp.eq.s32.totalorder %s24, 7
      %p59 = por %p57, %p58
      %p61 = scmp.ne.s32.totalorder %s44, %s60
      %p62 = scmp.eq.s32.totalorder %s24, 0
      %p63 = por %p61, %p62
      %s64 = ssub.s32 %s26, %s33
      %p65 = scmp.eq.s32.totalorder %s64, 0
      %s67 = sadd.s32 %s66, 1
      %s68 = scalar_select %p65, %s66, %s67
      %p71 = pneg %p65
      %p72 = scmp.eq.s32.totalorder %s18, 7
      %p73 = por %p71, %p72
      %p74 = scmp.ne.s32.totalorder %s66, %s69
      %p75 = scmp.eq.s32.totalorder %s18, 0
      %p76 = por %p74, %p75
      %p77 = scmp.ne.s32.totalorder %s66, %s69
      %p78 = scmp.eq.s32.totalorder %s23, 7
      %p79 = por %p77, %p78
      %p80 = scmp.ne.s32.totalorder %s69, %s70
      %p81 = scmp.eq.s32.totalorder %s23, 0
      %p82 = por %p80, %p81
      %p83 = scmp.ne.s32.totalorder %s69, %s70
      %p84 = scmp.eq.s32.totalorder %s24, 7
      %p85 = por %p83, %p84
      %p87 = scmp.ne.s32.totalorder %s70, %s86
      %p88 = scmp.eq.s32.totalorder %s24, 0
      %p89 = por %p87, %p88
      %s91 = sadd.s32 %s90, 1
      %p94 = scmp.eq.s32.totalorder %s18, 7
      %p95 = scmp.ne.s32.totalorder %s90, %s92
      %p96 = scmp.eq.s32.totalorder %s18, 0
      %p97 = por %p95, %p96
      %p98 = scmp.ne.s32.totalorder %s90, %s92
      %p99 = scmp.eq.s32.totalorder %s23, 7
      %p100 = por %p98, %p99
      %p101 = scmp.ne.s32.totalorder %s92, %s93
      %p102 = scmp.eq.s32.totalorder %s23, 0
      %p103 = por %p101, %p102
      %p104 = scmp.ne.s32.totalorder %s92, %s93
      %p105 = scmp.eq.s32.totalorder %s24, 7
      %p106 = por %p104, %p105
      %p108 = scmp.ne.s32.totalorder %s93, %s107
      %p109 = scmp.eq.s32.totalorder %s24, 0
      %p110 = por %p108, %p109
      %s112 = sadd.s32 %s111, 1
      %p115 = scmp.eq.s32.totalorder %s18, 7
      %p116 = scmp.ne.s32.totalorder %s111, %s113
      %p117 = scmp.eq.s32.totalorder %s18, 0
      %p118 = por %p116, %p117
      %p119 = scmp.ne.s32.totalorder %s111, %s113
      %p120 = scmp.eq.s32.totalorder %s23, 7
      %p121 = por %p119, %p120
      %p122 = scmp.ne.s32.totalorder %s113, %s114
      %p123 = scmp.eq.s32.totalorder %s23, 0
      %p124 = por %p122, %p123
      %p125 = scmp.ne.s32.totalorder %s113, %s114
      %p126 = scmp.eq.s32.totalorder %s24, 7
      %p127 = por %p125, %p126
      %p129 = scmp.ne.s32.totalorder %s114, %s128
      %p130 = scmp.eq.s32.totalorder %s24, 0
      %p131 = por %p129, %p130
      %s133 = sadd.s32 %s132, 1
      %p136 = scmp.eq.s32.totalorder %s18, 7
      %p137 = scmp.ne.s32.totalorder %s132, %s134
      %p138 = scmp.eq.s32.totalorder %s18, 0
      %p139 = por %p137, %p138
      %p140 = scmp.ne.s32.totalorder %s132, %s134
      %p141 = scmp.eq.s32.totalorder %s23, 7
      %p142 = por %p140, %p141
      %p143 = scmp.ne.s32.totalorder %s134, %s135
      %p144 = scmp.eq.s32.totalorder %s23, 0
      %p145 = por %p143, %p144
      %p146 = scmp.ne.s32.totalorder %s134, %s135
      %p147 = scmp.eq.s32.totalorder %s24, 7
      %p148 = por %p146, %p147
      %p150 = scmp.ne.s32.totalorder %s135, %s149
      %p151 = scmp.eq.s32.totalorder %s24, 0
      %p152 = por %p150, %p151
      %s153 = ssub.s32 %s25, %s37
      %s154 = ssub.s32 %s26, %s33
      %s155 = sor.u32 %s153, %s154
      %p156 = scmp.eq.s32.totalorder %s155, 0
      %s158 = sadd.s32 %s157, 1
      %s159 = scalar_select %p156, %s157, %s158
      %p162 = pneg %p156
      %p163 = scmp.eq.s32.totalorder %s18, 7
      %p164 = por %p162, %p163
      %p165 = scmp.ne.s32.totalorder %s157, %s160
      %p166 = scmp.eq.s32.totalorder %s18, 0
      %p167 = por %p165, %p166
      %p168 = scmp.ne.s32.totalorder %s157, %s160
      %p169 = scmp.eq.s32.totalorder %s23, 7
      %p170 = por %p168, %p169
      %p171 = scmp.ne.s32.totalorder %s160, %s161
      %p172 = scmp.eq.s32.totalorder %s23, 0
      %p173 = por %p171, %p172
      %p174 = scmp.ne.s32.totalorder %s160, %s161
      %p175 = scmp.eq.s32.totalorder %s24, 7
      %p176 = por %p174, %p175
      %p178 = scmp.ne.s32.totalorder %s161, %s177
      %p179 = scmp.eq.s32.totalorder %s24, 0
      %p180 = por %p178, %p179
      %p181 = scmp.le.s32.totalorder 1, %s18
      %p182 = scmp.lt.s32.totalorder %s18, 9
      %p183 = pnand %p181, %p182
      %p184 = pneg %p183
      // Predicated region
      $region9: #{tpu_custom_call.1} parent=5 // pred_check
        _
      $region10: #{tpu_custom_call.1} parent=5 // pred_check_branch
        %186 = sbr.rel (%p183) target = $region12
      $region11: #{tpu_custom_call.1} parent=5 // pred_region
        %s187 = ssub.s32 %s18, 1
        // Predicated region
        $region13: #{tpu_custom_call.1} parent=11 // pred_check
          %p188 = pneg %p103
        $region14: #{tpu_custom_call.1} parent=11 // pred_check_branch
          %190 = sbr.rel (%p188) target = $region16
        $region15: #{tpu_custom_call.1} parent=11 // pred_region
          _
        $region16: #{tpu_custom_call.1} parent=11 // pred_fallthru
          _
        // Predicated region
        $region17: #{tpu_custom_call.1} parent=11 // pred_check
          %p191 = pneg %p124
        $region18: #{tpu_custom_call.1} parent=11 // pred_check_branch
          %193 = sbr.rel (%p191) target = $region20
        $region19: #{tpu_custom_call.1} parent=11 // pred_region
          %s195 = ssub.s32 64, 64
          %196 = vsyncadd [#allocation6], %s195
          %s198 = sshll.u32 [#allocation5], 4
          %s199 = int_to_ptr.vmem [resolvable:$true] %s198
          %201 = dma.hbm_to_vmem [thread:$0]  %s3, 64, %s199, [#allocation6]
        $region20: #{tpu_custom_call.1} parent=11 // pred_fallthru
          _
        // Predicated region
        $region21: #{tpu_custom_call.1} parent=11 // pred_check
          %p202 = pneg %p145
        $region22: #{tpu_custom_call.1} parent=11 // pred_check_branch
          %204 = sbr.rel (%p202) target = $region24
        $region23: #{tpu_custom_call.1} parent=11 // pred_region
          %s206 = ssub.s32 16, 16
          %207 = vsyncadd [#allocation6], %s206
          %s209 = sshll.u32 [#allocation7], 4
          %s210 = int_to_ptr.vmem [resolvable:$true] %s209
          %212 = dma.hbm_to_vmem [thread:$0]  %s4, 16, %s210, [#allocation6]
        $region24: #{tpu_custom_call.1} parent=11 // pred_fallthru
          _
      $region12: #{tpu_custom_call.1} parent=5 // pred_fallthru
        _
      %p213 = scmp.lt.s32.totalorder %s18, 8
      // Predicated region
      $region25: #{tpu_custom_call.1} parent=5 // pred_check
        %p214 = pneg %p213
      $region26: #{tpu_custom_call.1} parent=5 // pred_check_branch
        %216 = sbr.rel (%p214) target = $region28
      $region27: #{tpu_custom_call.1} parent=5 // pred_region
        // Predicated region
        $region29: #{tpu_custom_call.1} parent=27 // pred_check
          %p217 = pneg %p50
        $region30: #{tpu_custom_call.1} parent=27 // pred_check_branch
          %219 = sbr.rel (%p217) target = $region32
        $region31: #{tpu_custom_call.1} parent=27 // pred_region
          %s220 = smul.u32 32, %s25
          %p221 = scmp.lt.s32.totalorder %s220, 63
          %s222 = scalar_select %p221, %s220, 63
          %s223 = smul.addr %s222, 2
          %s224 = smul.addr %s223, 8
          %s225 = scalar_lea.vmem %s0, %s224
          %s226 = smul.u32 32, %s25
        $region32: #{tpu_custom_call.1} parent=27 // pred_fallthru
          _
        // Predicated region
        $region33: #{tpu_custom_call.1} parent=27 // pred_check
          %p227 = pneg %p76
        $region34: #{tpu_custom_call.1} parent=27 // pred_check_branch
          %229 = sbr.rel (%p227) target = $region36
        $region35: #{tpu_custom_call.1} parent=27 // pred_region
          %s230 = sand.u32 %s66, 1
          %s231 = scalar_lea.sflag [#allocation3], %s230
          %s232 = sand.u32 %s66, 1
          %s233 = smul.addr %s232, 32
          %s234 = scalar_lea.vmem [#allocation2], %s233
          %s236 = ssub.s32 512, 512
          %237 = vsyncadd %s231, %s236
          %s238 = smul.addr %s26, 128
          %s239 = scalar_lea.hbm %s1, %s238
          %s240 = sshll.u32 %s234, 4
          %s241 = int_to_ptr.vmem [resolvable:$true] %s240
          %246 = dma.hbm_to_vmem [thread:$0]  %s239, 512, %s241, %s231, 512, 128, 8
        $region36: #{tpu_custom_call.1} parent=27 // pred_fallthru
          _
      $region28: #{tpu_custom_call.1} parent=5 // pred_fallthru
        _
      %p247 = scmp.le.s32.totalorder 1, %s18
      %p248 = scmp.lt.s32.totalorder %s18, 9
      %p249 = pnand %p247, %p248
      %p250 = pneg %p249
      // Predicated region
      $region37: #{tpu_custom_call.1} parent=5 // pred_check
        _
      $region38: #{tpu_custom_call.1} parent=5 // pred_check_branch
        %252 = sbr.rel (%p249) target = $region40
      $region39: #{tpu_custom_call.1} parent=5 // pred_region
        %s253 = ssub.s32 %s18, 1
        %s254 = sand.u32 %s69, 1
        %s255 = scalar_lea.sflag [#allocation3], %s254
        %s256 = sand.u32 %s69, 1
        %s257 = smul.addr %s256, 32
        %s258 = scalar_lea.vmem [#allocation2], %s257
        // Predicated region
        $region41: #{tpu_custom_call.1} parent=39 // pred_check
          %p259 = pneg %p82
        $region42: #{tpu_custom_call.1} parent=39 // pred_check_branch
          %261 = sbr.rel (%p259) target = $region44
        $region43: #{tpu_custom_call.1} parent=39 // pred_region
          %262 = dma.done %s255, 512
        $region44: #{tpu_custom_call.1} parent=39 // pred_fallthru
          _
        // Predicated region
        $region45: #{tpu_custom_call.1} parent=39 // pred_check
          %p263 = pneg %p124
        $region46: #{tpu_custom_call.1} parent=39 // pred_check_branch
          %265 = sbr.rel (%p263) target = $region48
        $region47: #{tpu_custom_call.1} parent=39 // pred_region
          %266 = dma.done [#allocation6], 64
        $region48: #{tpu_custom_call.1} parent=39 // pred_fallthru
          _
        // Predicated region
        $region49: #{tpu_custom_call.1} parent=39 // pred_check
          %p267 = pneg %p145
        $region50: #{tpu_custom_call.1} parent=39 // pred_check_branch
          %269 = sbr.rel (%p267) target = $region52
        $region51: #{tpu_custom_call.1} parent=39 // pred_region
          %270 = dma.done [#allocation6], 16
        $region52: #{tpu_custom_call.1} parent=39 // pred_fallthru
          _
        %s271 = smul.u32 32, %s27
        %p272 = scmp.lt.s32.totalorder %s271, 63
        %s273 = scalar_select %p272, %s271, 63
        %s274 = smul.addr %s273, 2
        %s275 = smul.addr %s274, 8
        %s276 = scalar_lea.vmem %s0, %s275
        %p277 = pneg %p56
        %p278 = pneg %p53
        %s279 = sand.u32 %s69, 1
        %s280 = scalar_lea.sflag [#allocation3], %s279
        %s281 = sand.u32 %s69, 1
        %s282 = smul.addr %s281, 32
        %s283 = scalar_lea.vmem [#allocation2], %s282
        %p284 = pneg %p82
        %p285 = pneg %p79
        %p286 = pneg %p103
        %p287 = pneg %p100
        %p288 = pneg %p124
        %p289 = pneg %p121
        %p290 = pneg %p145
        %p291 = pneg %p142
        %p292 = pneg %p173
        %p293 = pneg %p170
        %s294 = sand.u32 %s160, 1
        %s295 = scalar_lea.sflag [#allocation4], %s294
        %s296 = sand.u32 %s160, 1
        %s297 = smul.addr %s296, 512
        %s298 = scalar_lea.vmem [#allocation8], %s297
        %s299 = smul.u32 32, %s27
        %p300 = scmp.lt.s32.totalorder %s299, 63
        %s301 = scalar_select %p300, %s299, 63
        %s302 = smul.addr %s301, 2
        %s303 = smul.addr %s302, 8
        %s304 = scalar_lea.vmem %s0, %s303
        %s305 = smul.u32 32, %s27
        %s306 = smul.u32 32, %s27
        %v307 = vld [vmem:[%s304] sm:$0xff]
        %v308 = vld [vmem:[%s304 + $0x8] sm:$0xff]
        %v309 = vld [vmem:[%s304 + $0x10] sm:$0xff]
        %v310 = vld [vmem:[%s304 + $0x18] sm:$0xff]
        %v311 = vld [vmem:[%s304 + $0x20] sm:$0xff]
        %v312 = vld [vmem:[%s304 + $0x28] sm:$0xff]
        %v313 = vld [vmem:[%s304 + $0x30] sm:$0xff]
        %v314 = vld [vmem:[%s304 + $0x38] sm:$0xff]
        %v315 = vld [vmem:[%s304 + $0x40] sm:$0xff]
        %v316 = vld [vmem:[%s304 + $0x48] sm:$0xff]
        %v317 = vld [vmem:[%s304 + $0x50] sm:$0xff]
        %v318 = vld [vmem:[%s304 + $0x58] sm:$0xff]
        %v319 = vld [vmem:[%s304 + $0x60] sm:$0xff]
        %v320 = vld [vmem:[%s304 + $0x68] sm:$0xff]
        %v321 = vld [vmem:[%s304 + $0x70] sm:$0xff]
        %v322 = vld [vmem:[%s304 + $0x78] sm:$0xff]
        %v323 = vld [vmem:[%s304 + $0x80] sm:$0xff]
        %v324 = vld [vmem:[%s304 + $0x88] sm:$0xff]
        %v325 = vld [vmem:[%s304 + $0x90] sm:$0xff]
        %v326 = vld [vmem:[%s304 + $0x98] sm:$0xff]
        %v327 = vld [vmem:[%s304 + $0xa0] sm:$0xff]
        %v328 = vld [vmem:[%s304 + $0xa8] sm:$0xff]
        %v329 = vld [vmem:[%s304 + $0xb0] sm:$0xff]
        %v330 = vld [vmem:[%s304 + $0xb8] sm:$0xff]
        %v331 = vld [vmem:[%s304 + $0xc0] sm:$0xff]
        %v332 = vld [vmem:[%s304 + $0xc8] sm:$0xff]
        %v333 = vld [vmem:[%s304 + $0xd0] sm:$0xff]
        %v334 = vld [vmem:[%s304 + $0xd8] sm:$0xff]
        %v335 = vld [vmem:[%s304 + $0xe0] sm:$0xff]
        %v336 = vld [vmem:[%s304 + $0xe8] sm:$0xff]
        %v337 = vld [vmem:[%s304 + $0xf0] sm:$0xff]
        %v338 = vld [vmem:[%s304 + $0xf8] sm:$0xff]
        %v339 = vld [vmem:[%s304 + $0x100] sm:$0xff]
        %v340 = vld [vmem:[%s304 + $0x108] sm:$0xff]
        %v341 = vld [vmem:[%s304 + $0x110] sm:$0xff]
        %v342 = vld [vmem:[%s304 + $0x118] sm:$0xff]
        %v343 = vld [vmem:[%s304 + $0x120] sm:$0xff]
        %v344 = vld [vmem:[%s304 + $0x128] sm:$0xff]
        %v345 = vld [vmem:[%s304 + $0x130] sm:$0xff]
        %v346 = vld [vmem:[%s304 + $0x138] sm:$0xff]
        %v347 = vld [vmem:[%s304 + $0x140] sm:$0xff]
        %v348 = vld [vmem:[%s304 + $0x148] sm:$0xff]
        %v349 = vld [vmem:[%s304 + $0x150] sm:$0xff]
        %v350 = vld [vmem:[%s304 + $0x158] sm:$0xff]
        %v351 = vld [vmem:[%s304 + $0x160] sm:$0xff]
        %v352 = vld [vmem:[%s304 + $0x168] sm:$0xff]
        %v353 = vld [vmem:[%s304 + $0x170] sm:$0xff]
        %v354 = vld [vmem:[%s304 + $0x178] sm:$0xff]
        %v355 = vld [vmem:[%s304 + $0x180] sm:$0xff]
        %v356 = vld [vmem:[%s304 + $0x188] sm:$0xff]
        %v357 = vld [vmem:[%s304 + $0x190] sm:$0xff]
        %v358 = vld [vmem:[%s304 + $0x198] sm:$0xff]
        %v359 = vld [vmem:[%s304 + $0x1a0] sm:$0xff]
        %v360 = vld [vmem:[%s304 + $0x1a8] sm:$0xff]
        %v361 = vld [vmem:[%s304 + $0x1b0] sm:$0xff]
        %v362 = vld [vmem:[%s304 + $0x1b8] sm:$0xff]
        %v363 = vld [vmem:[%s304 + $0x1c0] sm:$0xff]
        %v364 = vld [vmem:[%s304 + $0x1c8] sm:$0xff]
        %v365 = vld [vmem:[%s304 + $0x1d0] sm:$0xff]
        %v366 = vld [vmem:[%s304 + $0x1d8] sm:$0xff]
        %v367 = vld [vmem:[%s304 + $0x1e0] sm:$0xff]
        %v368 = vld [vmem:[%s304 + $0x1e8] sm:$0xff]
        %v369 = vld [vmem:[%s304 + $0x1f0] sm:$0xff]
        %v370 = vld [vmem:[%s304 + $0x1f8] sm:$0xff]
        %v371 = vld [vmem:[%s258] sm:$0xff]
        %v372 = vld [vmem:[%s258 + $0x8] sm:$0xff]
        %v373 = vld [vmem:[%s258 + $0x10] sm:$0xff]
        %v374 = vld [vmem:[%s258 + $0x18] sm:$0xff]
        %vm375 = vcmask 261120
        %v377 = vsel %vm375, %v307, 0
        %v380 = vsel %vm375, %v308, 0
        %v383 = vsel %vm375, %v309, 0
        %v386 = vsel %vm375, %v310, 0
        %v389 = vsel %vm375, %v311, 0
        %v392 = vsel %vm375, %v312, 0
        %v395 = vsel %vm375, %v313, 0
        %v398 = vsel %vm375, %v314, 0
        %v401 = vsel %vm375, %v315, 0
        %v404 = vsel %vm375, %v316, 0
        %v407 = vsel %vm375, %v317, 0
        %v410 = vsel %vm375, %v318, 0
        %v413 = vsel %vm375, %v319, 0
        %v416 = vsel %vm375, %v320, 0
        %v419 = vsel %vm375, %v321, 0
        %v422 = vsel %vm375, %v322, 0
        %v425 = vsel %vm375, %v323, 0
        %v428 = vsel %vm375, %v324, 0
        %v431 = vsel %vm375, %v325, 0
        %v434 = vsel %vm375, %v326, 0
        %v437 = vsel %vm375, %v327, 0
        %v440 = vsel %vm375, %v328, 0
        %v443 = vsel %vm375, %v329, 0
        %v446 = vsel %vm375, %v330, 0
        %v449 = vsel %vm375, %v331, 0
        %v452 = vsel %vm375, %v332, 0
        %v455 = vsel %vm375, %v333, 0
        %v458 = vsel %vm375, %v334, 0
        %v461 = vsel %vm375, %v335, 0
        %v464 = vsel %vm375, %v336, 0
        %v467 = vsel %vm375, %v337, 0
        %v470 = vsel %vm375, %v338, 0
        %v473 = vsel %vm375, %v339, 0
        %v476 = vsel %vm375, %v340, 0
        %v479 = vsel %vm375, %v341, 0
        %v482 = vsel %vm375, %v342, 0
        %v485 = vsel %vm375, %v343, 0
        %v488 = vsel %vm375, %v344, 0
        %v491 = vsel %vm375, %v345, 0
        %v494 = vsel %vm375, %v346, 0
        %v497 = vsel %vm375, %v347, 0
        %v500 = vsel %vm375, %v348, 0
        %v503 = vsel %vm375, %v349, 0
        %v506 = vsel %vm375, %v350, 0
        %v509 = vsel %vm375, %v351, 0
        %v512 = vsel %vm375, %v352, 0
        %v515 = vsel %vm375, %v353, 0
        %v518 = vsel %vm375, %v354, 0
        %v521 = vsel %vm375, %v355, 0
        %v524 = vsel %vm375, %v356, 0
        %v527 = vsel %vm375, %v357, 0
        %v530 = vsel %vm375, %v358, 0
        %v533 = vsel %vm375, %v359, 0
        %v536 = vsel %vm375, %v360, 0
        %v539 = vsel %vm375, %v361, 0
        %v542 = vsel %vm375, %v362, 0
        %v545 = vsel %vm375, %v363, 0
        %v548 = vsel %vm375, %v364, 0
        %v551 = vsel %vm375, %v365, 0
        %v554 = vsel %vm375, %v366, 0
        %v557 = vsel %vm375, %v367, 0
        %v560 = vsel %vm375, %v368, 0
        %v563 = vsel %vm375, %v369, 0
        %v566 = vsel %vm375, %v370, 0
        %568 = vmatprep.subr.mxu0 0.0
        %569 = vmatpush1.msra.mxu0 0.0
        %570 = vmatprep.subr.mxu0 0.0
        %571 = vmatpush1.msra.mxu0 0.0
        %572 = vmatprep.subr.mxu0 0.0
        %573 = vmatpush1.msra.mxu0 0.0
        %574 = vmatprep.subr.mxu0 0.0
        %575 = vmatpush1.msra.mxu0 0.0
        %576 = vmatprep.subr.mxu0 0.0
        %577 = vmatpush1.msra.mxu0 0.0
        %578 = vmatprep.subr.mxu0 0.0
        %579 = vmatpush1.msra.mxu0 0.0
        %580 = vmatprep.subr.mxu0 0.0
        %581 = vmatpush1.msra.mxu0 0.0
        %582 = vmatprep.subr.mxu0 0.0
        %583 = vmatpush1.msra.mxu0 0.0
        %584 = vmatprep.subr.mxu0 0.0
        %585 = vmatpush1.msra.mxu0 0.0
        %586 = vmatprep.subr.mxu0 0.0
        %587 = vmatpush1.msra.mxu0 0.0
        %588 = vmatprep.subr.mxu0 0.0
        %589 = vmatpush1.msra.mxu0 0.0
        %590 = vmatprep.subr.mxu0 0.0
        %591 = vmatpush1.msra.mxu0 0.0
        %592 = vmatprep.subr.mxu0 0.0
        %593 = vmatpush1.msra.mxu0 %v374
        %594 = vmatprep.subr.mxu0 0.0
        %595 = vmatpush1.msra.mxu0 %v373
        %596 = vmatprep.subr.mxu0 0.0
        %597 = vmatpush1.msra.mxu0 %v372
        %598 = vmatprep.subr.mxu0 0.0
        %599 = vmatpush1.msra.mxu0 %v371
        %600 = vmatprep.subr.mxu0 0.0
        %601 = vmatpush2.msra.mxu0 0.0
        %602 = vmatprep.subr.mxu0 0.0
        %603 = vmatpush2.msra.mxu0 0.0
        %604 = vmatprep.subr.mxu0 0.0
        %605 = vmatpush2.msra.mxu0 0.0
        %606 = vmatprep.subr.mxu0 0.0
        %607 = vmatpush2.msra.mxu0 0.0
        %608 = vmatprep.subr.mxu0 0.0
        %609 = vmatpush2.msra.mxu0 0.0
        %610 = vmatprep.subr.mxu0 0.0
        %611 = vmatpush2.msra.mxu0 0.0
        %612 = vmatprep.subr.mxu0 0.0
        %613 = vmatpush2.msra.mxu0 0.0
        %614 = vmatprep.subr.mxu0 0.0
        %615 = vmatpush2.msra.mxu0 0.0
        %616 = vmatprep.subr.mxu0 0.0
        %617 = vmatpush2.msra.mxu0 0.0
        %618 = vmatprep.subr.mxu0 0.0
        %619 = vmatpush2.msra.mxu0 0.0
        %620 = vmatprep.subr.mxu0 0.0
        %621 = vmatpush2.msra.mxu0 0.0
        %622 = vmatprep.subr.mxu0 0.0
        %623 = vmatpush2.msra.mxu0 0.0
        %624 = vmatprep.subr.mxu0 0.0
        %625 = vmatpush2.msra.mxu0 0.0
        %626 = vmatprep.subr.mxu0 0.0
        %627 = vmatpush2.msra.mxu0 0.0
        %628 = vmatprep.subr.mxu0 0.0
        %629 = vmatpush2.msra.mxu0 0.0
        %630 = vmatprep.subr.mxu0 0.0
        %631 = vmatpush2.msra.mxu0 0.0
        %632 = vmatprep.mubr.f32.mxu0 0.0
        %633 = vmatmul.mubr.f32.gmra.mxu0 %v377
        %v634 = vpop.f32.mrf.mxu0
        %v635 = vadd.f32 0.0, %v634
        %v636 = vpop.f32.mrf.mxu0
        %637 = vmatprep.mubr.f32.mxu0 0.0
        %638 = vmatmul.mubr.f32.gmra.mxu0 %v380
        %v639 = vpop.f32.mrf.mxu0
        %v640 = vadd.f32 0.0, %v639
        %v641 = vpop.f32.mrf.mxu0
        %642 = vmatprep.mubr.f32.mxu0 0.0
        %643 = vmatmul.mubr.f32.gmra.mxu0 %v383
        %v644 = vpop.f32.mrf.mxu0
        %v645 = vadd.f32 0.0, %v644
        %v646 = vpop.f32.mrf.mxu0
        %647 = vmatprep.mubr.f32.mxu0 0.0
        %648 = vmatmul.mubr.f32.gmra.mxu0 %v386
        %v649 = vpop.f32.mrf.mxu0
        %v650 = vadd.f32 0.0, %v649
        %v651 = vpop.f32.mrf.mxu0
        %652 = vmatprep.mubr.f32.mxu0 0.0
        %653 = vmatmul.mubr.f32.gmra.mxu0 %v389
        %v654 = vpop.f32.mrf.mxu0
        %v655 = vadd.f32 0.0, %v654
        %v656 = vpop.f32.mrf.mxu0
        %657 = vmatprep.mubr.f32.mxu0 0.0
        %658 = vmatmul.mubr.f32.gmra.mxu0 %v392
        %v659 = vpop.f32.mrf.mxu0
        %v660 = vadd.f32 0.0, %v659
        %v661 = vpop.f32.mrf.mxu0
        %662 = vmatprep.mubr.f32.mxu0 0.0
        %663 = vmatmul.mubr.f32.gmra.mxu0 %v395
        %v664 = vpop.f32.mrf.mxu0
        %v665 = vadd.f32 0.0, %v664
        %v666 = vpop.f32.mrf.mxu0
        %667 = vmatprep.mubr.f32.mxu0 0.0
        %668 = vmatmul.mubr.f32.gmra.mxu0 %v398
        %v669 = vpop.f32.mrf.mxu0
        %v670 = vadd.f32 0.0, %v669
        %v671 = vpop.f32.mrf.mxu0
        %672 = vmatprep.mubr.f32.mxu0 0.0
        %673 = vmatmul.mubr.f32.gmra.mxu0 %v401
        %v674 = vpop.f32.mrf.mxu0
        %v675 = vadd.f32 0.0, %v674
        %v676 = vpop.f32.mrf.mxu0
        %677 = vmatprep.mubr.f32.mxu0 0.0
        %678 = vmatmul.mubr.f32.gmra.mxu0 %v404
        %v679 = vpop.f32.mrf.mxu0
        %v680 = vadd.f32 0.0, %v679
        %v681 = vpop.f32.mrf.mxu0
        %682 = vmatprep.mubr.f32.mxu0 0.0
        %683 = vmatmul.mubr.f32.gmra.mxu0 %v407
        %v684 = vpop.f32.mrf.mxu0
        %v685 = vadd.f32 0.0, %v684
        %v686 = vpop.f32.mrf.mxu0
        %687 = vmatprep.mubr.f32.mxu0 0.0
        %688 = vmatmul.mubr.f32.gmra.mxu0 %v410
        %v689 = vpop.f32.mrf.mxu0
        %v690 = vadd.f32 0.0, %v689
        %v691 = vpop.f32.mrf.mxu0
        %692 = vmatprep.mubr.f32.mxu0 0.0
        %693 = vmatmul.mubr.f32.gmra.mxu0 %v413
        %v694 = vpop.f32.mrf.mxu0
        %v695 = vadd.f32 0.0, %v694
        %v696 = vpop.f32.mrf.mxu0
        %697 = vmatprep.mubr.f32.mxu0 0.0
        %698 = vmatmul.mubr.f32.gmra.mxu0 %v416
        %v699 = vpop.f32.mrf.mxu0
        %v700 = vadd.f32 0.0, %v699
        %v701 = vpop.f32.mrf.mxu0
        %702 = vmatprep.mubr.f32.mxu0 0.0
        %703 = vmatmul.mubr.f32.gmra.mxu0 %v419
        %v704 = vpop.f32.mrf.mxu0
        %v705 = vadd.f32 0.0, %v704
        %v706 = vpop.f32.mrf.mxu0
        %707 = vmatprep.mubr.f32.mxu0 0.0
        %708 = vmatmul.mubr.f32.gmra.mxu0 %v422
        %v709 = vpop.f32.mrf.mxu0
        %v710 = vadd.f32 0.0, %v709
        %v711 = vpop.f32.mrf.mxu0
        %712 = vmatprep.mubr.f32.mxu0 0.0
        %713 = vmatmul.mubr.f32.gmra.mxu0 %v425
        %v714 = vpop.f32.mrf.mxu0
        %v715 = vadd.f32 0.0, %v714
        %v716 = vpop.f32.mrf.mxu0
        %717 = vmatprep.mubr.f32.mxu0 0.0
        %718 = vmatmul.mubr.f32.gmra.mxu0 %v428
        %v719 = vpop.f32.mrf.mxu0
        %v720 = vadd.f32 0.0, %v719
        %v721 = vpop.f32.mrf.mxu0
        %722 = vmatprep.mubr.f32.mxu0 0.0
        %723 = vmatmul.mubr.f32.gmra.mxu0 %v431
        %v724 = vpop.f32.mrf.mxu0
        %v725 = vadd.f32 0.0, %v724
        %v726 = vpop.f32.mrf.mxu0
        %727 = vmatprep.mubr.f32.mxu0 0.0
        %728 = vmatmul.mubr.f32.gmra.mxu0 %v434
        %v729 = vpop.f32.mrf.mxu0
        %v730 = vadd.f32 0.0, %v729
        %v731 = vpop.f32.mrf.mxu0
        %732 = vmatprep.mubr.f32.mxu0 0.0
        %733 = vmatmul.mubr.f32.gmra.mxu0 %v437
        %v734 = vpop.f32.mrf.mxu0
        %v735 = vadd.f32 0.0, %v734
        %v736 = vpop.f32.mrf.mxu0
        %737 = vmatprep.mubr.f32.mxu0 0.0
        %738 = vmatmul.mubr.f32.gmra.mxu0 %v440
        %v739 = vpop.f32.mrf.mxu0
        %v740 = vadd.f32 0.0, %v739
        %v741 = vpop.f32.mrf.mxu0
        %742 = vmatprep.mubr.f32.mxu0 0.0
        %743 = vmatmul.mubr.f32.gmra.mxu0 %v443
        %v744 = vpop.f32.mrf.mxu0
        %v745 = vadd.f32 0.0, %v744
        %v746 = vpop.f32.mrf.mxu0
        %747 = vmatprep.mubr.f32.mxu0 0.0
        %748 = vmatmul.mubr.f32.gmra.mxu0 %v446
        %v749 = vpop.f32.mrf.mxu0
        %v750 = vadd.f32 0.0, %v749
        %v751 = vpop.f32.mrf.mxu0
        %752 = vmatprep.mubr.f32.mxu0 0.0
        %753 = vmatmul.mubr.f32.gmra.mxu0 %v449
        %v754 = vpop.f32.mrf.mxu0
        %v755 = vadd.f32 0.0, %v754
        %v756 = vpop.f32.mrf.mxu0
        %757 = vmatprep.mubr.f32.mxu0 0.0
        %758 = vmatmul.mubr.f32.gmra.mxu0 %v452
        %v759 = vpop.f32.mrf.mxu0
        %v760 = vadd.f32 0.0, %v759
        %v761 = vpop.f32.mrf.mxu0
        %762 = vmatprep.mubr.f32.mxu0 0.0
        %763 = vmatmul.mubr.f32.gmra.mxu0 %v455
        %v764 = vpop.f32.mrf.mxu0
        %v765 = vadd.f32 0.0, %v764
        %v766 = vpop.f32.mrf.mxu0
        %767 = vmatprep.mubr.f32.mxu0 0.0
        %768 = vmatmul.mubr.f32.gmra.mxu0 %v458
        %v769 = vpop.f32.mrf.mxu0
        %v770 = vadd.f32 0.0, %v769
        %v771 = vpop.f32.mrf.mxu0
        %772 = vmatprep.mubr.f32.mxu0 0.0
        %773 = vmatmul.mubr.f32.gmra.mxu0 %v461
        %v774 = vpop.f32.mrf.mxu0
        %v775 = vadd.f32 0.0, %v774
        %v776 = vpop.f32.mrf.mxu0
        %777 = vmatprep.mubr.f32.mxu0 0.0
        %778 = vmatmul.mubr.f32.gmra.mxu0 %v464
        %v779 = vpop.f32.mrf.mxu0
        %v780 = vadd.f32 0.0, %v779
        %v781 = vpop.f32.mrf.mxu0
        %782 = vmatprep.mubr.f32.mxu0 0.0
        %783 = vmatmul.mubr.f32.gmra.mxu0 %v467
        %v784 = vpop.f32.mrf.mxu0
        %v785 = vadd.f32 0.0, %v784
        %v786 = vpop.f32.mrf.mxu0
        %787 = vmatprep.mubr.f32.mxu0 0.0
        %788 = vmatmul.mubr.f32.gmra.mxu0 %v470
        %v789 = vpop.f32.mrf.mxu0
        %v790 = vadd.f32 0.0, %v789
        %v791 = vpop.f32.mrf.mxu0
        %792 = vmatprep.mubr.f32.mxu0 0.0
        %793 = vmatmul.mubr.f32.gmra.mxu0 %v473
        %v794 = vpop.f32.mrf.mxu0
        %v795 = vadd.f32 0.0, %v794
        %v796 = vpop.f32.mrf.mxu0
        %797 = vmatprep.mubr.f32.mxu0 0.0
        %798 = vmatmul.mubr.f32.gmra.mxu0 %v476
        %v799 = vpop.f32.mrf.mxu0
        %v800 = vadd.f32 0.0, %v799
        %v801 = vpop.f32.mrf.mxu0
        %802 = vmatprep.mubr.f32.mxu0 0.0
        %803 = vmatmul.mubr.f32.gmra.mxu0 %v479
        %v804 = vpop.f32.mrf.mxu0
        %v805 = vadd.f32 0.0, %v804
        %v806 = vpop.f32.mrf.mxu0
        %807 = vmatprep.mubr.f32.mxu0 0.0
        %808 = vmatmul.mubr.f32.gmra.mxu0 %v482
        %v809 = vpop.f32.mrf.mxu0
        %v810 = vadd.f32 0.0, %v809
        %v811 = vpop.f32.mrf.mxu0
        %812 = vmatprep.mubr.f32.mxu0 0.0
        %813 = vmatmul.mubr.f32.gmra.mxu0 %v485
        %v814 = vpop.f32.mrf.mxu0
        %v815 = vadd.f32 0.0, %v814
        %v816 = vpop.f32.mrf.mxu0
        %817 = vmatprep.mubr.f32.mxu0 0.0
        %818 = vmatmul.mubr.f32.gmra.mxu0 %v488
        %v819 = vpop.f32.mrf.mxu0
        %v820 = vadd.f32 0.0, %v819
        %v821 = vpop.f32.mrf.mxu0
        %822 = vmatprep.mubr.f32.mxu0 0.0
        %823 = vmatmul.mubr.f32.gmra.mxu0 %v491
        %v824 = vpop.f32.mrf.mxu0
        %v825 = vadd.f32 0.0, %v824
        %v826 = vpop.f32.mrf.mxu0
        %827 = vmatprep.mubr.f32.mxu0 0.0
        %828 = vmatmul.mubr.f32.gmra.mxu0 %v494
        %v829 = vpop.f32.mrf.mxu0
        %v830 = vadd.f32 0.0, %v829
        %v831 = vpop.f32.mrf.mxu0
        %832 = vmatprep.mubr.f32.mxu0 0.0
        %833 = vmatmul.mubr.f32.gmra.mxu0 %v497
        %v834 = vpop.f32.mrf.mxu0
        %v835 = vadd.f32 0.0, %v834
        %v836 = vpop.f32.mrf.mxu0
        %837 = vmatprep.mubr.f32.mxu0 0.0
        %838 = vmatmul.mubr.f32.gmra.mxu0 %v500
        %v839 = vpop.f32.mrf.mxu0
        %v840 = vadd.f32 0.0, %v839
        %v841 = vpop.f32.mrf.mxu0
        %842 = vmatprep.mubr.f32.mxu0 0.0
        %843 = vmatmul.mubr.f32.gmra.mxu0 %v503
        %v844 = vpop.f32.mrf.mxu0
        %v845 = vadd.f32 0.0, %v844
        %v846 = vpop.f32.mrf.mxu0
        %847 = vmatprep.mubr.f32.mxu0 0.0
        %848 = vmatmul.mubr.f32.gmra.mxu0 %v506
        %v849 = vpop.f32.mrf.mxu0
        %v850 = vadd.f32 0.0, %v849
        %v851 = vpop.f32.mrf.mxu0
        %852 = vmatprep.mubr.f32.mxu0 0.0
        %853 = vmatmul.mubr.f32.gmra.mxu0 %v509
        %v854 = vpop.f32.mrf.mxu0
        %v855 = vadd.f32 0.0, %v854
        %v856 = vpop.f32.mrf.mxu0
        %857 = vmatprep.mubr.f32.mxu0 0.0
        %858 = vmatmul.mubr.f32.gmra.mxu0 %v512
        %v859 = vpop.f32.mrf.mxu0
        %v860 = vadd.f32 0.0, %v859
        %v861 = vpop.f32.mrf.mxu0
        %862 = vmatprep.mubr.f32.mxu0 0.0
        %863 = vmatmul.mubr.f32.gmra.mxu0 %v515
        %v864 = vpop.f32.mrf.mxu0
        %v865 = vadd.f32 0.0, %v864
        %v866 = vpop.f32.mrf.mxu0
        %867 = vmatprep.mubr.f32.mxu0 0.0
        %868 = vmatmul.mubr.f32.gmra.mxu0 %v518
        %v869 = vpop.f32.mrf.mxu0
        %v870 = vadd.f32 0.0, %v869
        %v871 = vpop.f32.mrf.mxu0
        %872 = vmatprep.mubr.f32.mxu0 0.0
        %873 = vmatmul.mubr.f32.gmra.mxu0 %v521
        %v874 = vpop.f32.mrf.mxu0
        %v875 = vadd.f32 0.0, %v874
        %v876 = vpop.f32.mrf.mxu0
        %877 = vmatprep.mubr.f32.mxu0 0.0
        %878 = vmatmul.mubr.f32.gmra.mxu0 %v524
        %v879 = vpop.f32.mrf.mxu0
        %v880 = vadd.f32 0.0, %v879
        %v881 = vpop.f32.mrf.mxu0
        %882 = vmatprep.mubr.f32.mxu0 0.0
        %883 = vmatmul.mubr.f32.gmra.mxu0 %v527
        %v884 = vpop.f32.mrf.mxu0
        %v885 = vadd.f32 0.0, %v884
        %v886 = vpop.f32.mrf.mxu0
        %887 = vmatprep.mubr.f32.mxu0 0.0
        %888 = vmatmul.mubr.f32.gmra.mxu0 %v530
        %v889 = vpop.f32.mrf.mxu0
        %v890 = vadd.f32 0.0, %v889
        %v891 = vpop.f32.mrf.mxu0
        %892 = vmatprep.mubr.f32.mxu0 0.0
        %893 = vmatmul.mubr.f32.gmra.mxu0 %v533
        %v894 = vpop.f32.mrf.mxu0
        %v895 = vadd.f32 0.0, %v894
        %v896 = vpop.f32.mrf.mxu0
        %897 = vmatprep.mubr.f32.mxu0 0.0
        %898 = vmatmul.mubr.f32.gmra.mxu0 %v536
        %v899 = vpop.f32.mrf.mxu0
        %v900 = vadd.f32 0.0, %v899
        %v901 = vpop.f32.mrf.mxu0
        %902 = vmatprep.mubr.f32.mxu0 0.0
        %903 = vmatmul.mubr.f32.gmra.mxu0 %v539
        %v904 = vpop.f32.mrf.mxu0
        %v905 = vadd.f32 0.0, %v904
        %v906 = vpop.f32.mrf.mxu0
        %907 = vmatprep.mubr.f32.mxu0 0.0
        %908 = vmatmul.mubr.f32.gmra.mxu0 %v542
        %v909 = vpop.f32.mrf.mxu0
        %v910 = vadd.f32 0.0, %v909
        %v911 = vpop.f32.mrf.mxu0
        %912 = vmatprep.mubr.f32.mxu0 0.0
        %913 = vmatmul.mubr.f32.gmra.mxu0 %v545
        %v914 = vpop.f32.mrf.mxu0
        %v915 = vadd.f32 0.0, %v914
        %v916 = vpop.f32.mrf.mxu0
        %917 = vmatprep.mubr.f32.mxu0 0.0
        %918 = vmatmul.mubr.f32.gmra.mxu0 %v548
        %v919 = vpop.f32.mrf.mxu0
        %v920 = vadd.f32 0.0, %v919
        %v921 = vpop.f32.mrf.mxu0
        %922 = vmatprep.mubr.f32.mxu0 0.0
        %923 = vmatmul.mubr.f32.gmra.mxu0 %v551
        %v924 = vpop.f32.mrf.mxu0
        %v925 = vadd.f32 0.0, %v924
        %v926 = vpop.f32.mrf.mxu0
        %927 = vmatprep.mubr.f32.mxu0 0.0
        %928 = vmatmul.mubr.f32.gmra.mxu0 %v554
        %v929 = vpop.f32.mrf.mxu0
        %v930 = vadd.f32 0.0, %v929
        %v931 = vpop.f32.mrf.mxu0
        %932 = vmatprep.mubr.f32.mxu0 0.0
        %933 = vmatmul.mubr.f32.gmra.mxu0 %v557
        %v934 = vpop.f32.mrf.mxu0
        %v935 = vadd.f32 0.0, %v934
        %v936 = vpop.f32.mrf.mxu0
        %937 = vmatprep.mubr.f32.mxu0 0.0
        %938 = vmatmul.mubr.f32.gmra.mxu0 %v560
        %v939 = vpop.f32.mrf.mxu0
        %v940 = vadd.f32 0.0, %v939
        %v941 = vpop.f32.mrf.mxu0
        %942 = vmatprep.mubr.f32.mxu0 0.0
        %943 = vmatmul.mubr.f32.gmra.mxu0 %v563
        %v944 = vpop.f32.mrf.mxu0
        %v945 = vadd.f32 0.0, %v944
        %v946 = vpop.f32.mrf.mxu0
        %947 = vmatprep.mubr.f32.mxu0 0.0
        %948 = vmatmul.mubr.f32.gmra.mxu0 %v566
        %v949 = vpop.f32.mrf.mxu0
        %v950 = vadd.f32 0.0, %v949
        %v951 = vpop.f32.mrf.mxu0
        %952 = vdwg.mxu0
        %v953 = vmul.f32 %v635, %v635
        %v954 = vmul.f32 %v640, %v640
        %v955 = vmul.f32 %v645, %v645
        %v956 = vmul.f32 %v650, %v650
        %v957 = vmul.f32 %v655, %v655
        %v958 = vmul.f32 %v660, %v660
        %v959 = vmul.f32 %v665, %v665
        %v960 = vmul.f32 %v670, %v670
        %v961 = vmul.f32 %v675, %v675
        %v962 = vmul.f32 %v680, %v680
        %v963 = vmul.f32 %v685, %v685
        %v964 = vmul.f32 %v690, %v690
        %v965 = vmul.f32 %v695, %v695
        %v966 = vmul.f32 %v700, %v700
        %v967 = vmul.f32 %v705, %v705
        %v968 = vmul.f32 %v710, %v710
        %v969 = vmul.f32 %v715, %v715
        %v970 = vmul.f32 %v720, %v720
        %v971 = vmul.f32 %v725, %v725
        %v972 = vmul.f32 %v730, %v730
        %v973 = vmul.f32 %v735, %v735
        %v974 = vmul.f32 %v740, %v740
        %v975 = vmul.f32 %v745, %v745
        %v976 = vmul.f32 %v750, %v750
        %v977 = vmul.f32 %v755, %v755
        %v978 = vmul.f32 %v760, %v760
        %v979 = vmul.f32 %v765, %v765
        %v980 = vmul.f32 %v770, %v770
        %v981 = vmul.f32 %v775, %v775
        %v982 = vmul.f32 %v780, %v780
        %v983 = vmul.f32 %v785, %v785
        %v984 = vmul.f32 %v790, %v790
        %v985 = vmul.f32 %v795, %v795
        %v986 = vmul.f32 %v800, %v800
        %v987 = vmul.f32 %v805, %v805
        %v988 = vmul.f32 %v810, %v810
        %v989 = vmul.f32 %v815, %v815
        %v990 = vmul.f32 %v820, %v820
        %v991 = vmul.f32 %v825, %v825
        %v992 = vmul.f32 %v830, %v830
        %v993 = vmul.f32 %v835, %v835
        %v994 = vmul.f32 %v840, %v840
        %v995 = vmul.f32 %v845, %v845
        %v996 = vmul.f32 %v850, %v850
        %v997 = vmul.f32 %v855, %v855
        %v998 = vmul.f32 %v860, %v860
        %v999 = vmul.f32 %v865, %v865
        %v1000 = vmul.f32 %v870, %v870
        %v1001 = vmul.f32 %v875, %v875
        %v1002 = vmul.f32 %v880, %v880
        %v1003 = vmul.f32 %v885, %v885
        %v1004 = vmul.f32 %v890, %v890
        %v1005 = vmul.f32 %v895, %v895
        %v1006 = vmul.f32 %v900, %v900
        %v1007 = vmul.f32 %v905, %v905
        %v1008 = vmul.f32 %v910, %v910
        %v1009 = vmul.f32 %v915, %v915
        %v1010 = vmul.f32 %v920, %v920
        %v1011 = vmul.f32 %v925, %v925
        %v1012 = vmul.f32 %v930, %v930
        %v1013 = vmul.f32 %v935, %v935
        %v1014 = vmul.f32 %v940, %v940
        %v1015 = vmul.f32 %v945, %v945
        %v1016 = vmul.f32 %v950, %v950
        %v1017 = vld [vmem:[%s2] sm:$0xff]
        %v1018 = vld [vmem:[%s2 + $0x8] sm:$0xff]
        %v1019 = vld [vmem:[%s2 + $0x10] sm:$0xff]
        %v1020 = vld [vmem:[%s2 + $0x18] sm:$0xff]
        %v1021 = vld [vmem:[%s2 + $0x20] sm:$0xff]
        %v1022 = vld [vmem:[%s2 + $0x28] sm:$0xff]
        %v1023 = vld [vmem:[%s2 + $0x30] sm:$0xff]
        %v1024 = vld [vmem:[%s2 + $0x38] sm:$0xff]
        %v1025 = vld [vmem:[%s2 + $0x40] sm:$0xff]
        %v1026 = vld [vmem:[%s2 + $0x48] sm:$0xff]
        %v1027 = vld [vmem:[%s2 + $0x50] sm:$0xff]
        %v1028 = vld [vmem:[%s2 + $0x58] sm:$0xff]
        %v1029 = vld [vmem:[%s2 + $0x60] sm:$0xff]
        %v1030 = vld [vmem:[%s2 + $0x68] sm:$0xff]
        %v1031 = vld [vmem:[%s2 + $0x70] sm:$0xff]
        %v1032 = vld [vmem:[%s2 + $0x78] sm:$0xff]
        %1033 = vmatprep.subr.mxu0 0.0
        %1034 = vmatpush1.msra.mxu0 %v1032
        %1035 = vmatprep.subr.mxu0 0.0
        %1036 = vmatpush1.msra.mxu0 %v1031
        %1037 = vmatprep.subr.mxu0 0.0
        %1038 = vmatpush1.msra.mxu0 %v1030
        %1039 = vmatprep.subr.mxu0 0.0
        %1040 = vmatpush1.msra.mxu0 %v1029
        %1041 = vmatprep.subr.mxu0 0.0
        %1042 = vmatpush1.msra.mxu0 %v1028
        %1043 = vmatprep.subr.mxu0 0.0
        %1044 = vmatpush1.msra.mxu0 %v1027
        %1045 = vmatprep.subr.mxu0 0.0
        %1046 = vmatpush1.msra.mxu0 %v1026
        %1047 = vmatprep.subr.mxu0 0.0
        %1048 = vmatpush1.msra.mxu0 %v1025
        %1049 = vmatprep.subr.mxu0 0.0
        %1050 = vmatpush1.msra.mxu0 %v1024
        %1051 = vmatprep.subr.mxu0 0.0
        %1052 = vmatpush1.msra.mxu0 %v1023
        %1053 = vmatprep.subr.mxu0 0.0
        %1054 = vmatpush1.msra.mxu0 %v1022
        %1055 = vmatprep.subr.mxu0 0.0
        %1056 = vmatpush1.msra.mxu0 %v1021
        %1057 = vmatprep.subr.mxu0 0.0
        %1058 = vmatpush1.msra.mxu0 %v1020
        %1059 = vmatprep.subr.mxu0 0.0
        %1060 = vmatpush1.msra.mxu0 %v1019
        %1061 = vmatprep.subr.mxu0 0.0
        %1062 = vmatpush1.msra.mxu0 %v1018
        %1063 = vmatprep.subr.mxu0 0.0
        %1064 = vmatpush1.msra.mxu0 %v1017
        %1065 = vmatprep.subr.mxu0 0.0
        %1066 = vmatpush2.msra.mxu0 0.0
        %1067 = vmatprep.subr.mxu0 0.0
        %1068 = vmatpush2.msra.mxu0 0.0
        %1069 = vmatprep.subr.mxu0 0.0
        %1070 = vmatpush2.msra.mxu0 0.0
        %1071 = vmatprep.subr.mxu0 0.0
        %1072 = vmatpush2.msra.mxu0 0.0
        %1073 = vmatprep.subr.mxu0 0.0
        %1074 = vmatpush2.msra.mxu0 0.0
        %1075 = vmatprep.subr.mxu0 0.0
        %1076 = vmatpush2.msra.mxu0 0.0
        %1077 = vmatprep.subr.mxu0 0.0
        %1078 = vmatpush2.msra.mxu0 0.0
        %1079 = vmatprep.subr.mxu0 0.0
        %1080 = vmatpush2.msra.mxu0 0.0
        %1081 = vmatprep.subr.mxu0 0.0
        %1082 = vmatpush2.msra.mxu0 0.0
        %1083 = vmatprep.subr.mxu0 0.0
        %1084 = vmatpush2.msra.mxu0 0.0
        %1085 = vmatprep.subr.mxu0 0.0
        %1086 = vmatpush2.msra.mxu0 0.0
        %1087 = vmatprep.subr.mxu0 0.0
        %1088 = vmatpush2.msra.mxu0 0.0
        %1089 = vmatprep.subr.mxu0 0.0
        %1090 = vmatpush2.msra.mxu0 0.0
        %1091 = vmatprep.subr.mxu0 0.0
        %1092 = vmatpush2.msra.mxu0 0.0
        %1093 = vmatprep.subr.mxu0 0.0
        %1094 = vmatpush2.msra.mxu0 0.0
        %1095 = vmatprep.subr.mxu0 0.0
        %1096 = vmatpush2.msra.mxu0 0.0
        %1097 = vmatprep.mubr.f32.mxu0 0.0
        %1098 = vmatmul.mubr.f32.gmra.mxu0 %v953
        %v1099 = vpop.f32.mrf.mxu0
        %v1100 = vadd.f32 1e-05, %v1099
        %v1101 = vpop.f32.mrf.mxu0
        %1102 = vmatprep.mubr.f32.mxu0 0.0
        %1103 = vmatmul.mubr.f32.gmra.mxu0 %v954
        %v1104 = vpop.f32.mrf.mxu0
        %v1105 = vadd.f32 1e-05, %v1104
        %v1106 = vpop.f32.mrf.mxu0
        %1107 = vmatprep.mubr.f32.mxu0 0.0
        %1108 = vmatmul.mubr.f32.gmra.mxu0 %v955
        %v1109 = vpop.f32.mrf.mxu0
        %v1110 = vadd.f32 1e-05, %v1109
        %v1111 = vpop.f32.mrf.mxu0
        %1112 = vmatprep.mubr.f32.mxu0 0.0
        %1113 = vmatmul.mubr.f32.gmra.mxu0 %v956
        %v1114 = vpop.f32.mrf.mxu0
        %v1115 = vadd.f32 1e-05, %v1114
        %v1116 = vpop.f32.mrf.mxu0
        %1117 = vmatprep.mubr.f32.mxu0 0.0
        %1118 = vmatmul.mubr.f32.gmra.mxu0 %v957
        %v1119 = vpop.f32.mrf.mxu0
        %v1120 = vadd.f32 1e-05, %v1119
        %v1121 = vpop.f32.mrf.mxu0
        %1122 = vmatprep.mubr.f32.mxu0 0.0
        %1123 = vmatmul.mubr.f32.gmra.mxu0 %v958
        %v1124 = vpop.f32.mrf.mxu0
        %v1125 = vadd.f32 1e-05, %v1124
        %v1126 = vpop.f32.mrf.mxu0
        %1127 = vmatprep.mubr.f32.mxu0 0.0
        %1128 = vmatmul.mubr.f32.gmra.mxu0 %v959
        %v1129 = vpop.f32.mrf.mxu0
        %v1130 = vadd.f32 1e-05, %v1129
        %v1131 = vpop.f32.mrf.mxu0
        %1132 = vmatprep.mubr.f32.mxu0 0.0
        %1133 = vmatmul.mubr.f32.gmra.mxu0 %v960
        %v1134 = vpop.f32.mrf.mxu0
        %v1135 = vadd.f32 1e-05, %v1134
        %v1136 = vpop.f32.mrf.mxu0
        %1137 = vmatprep.mubr.f32.mxu0 0.0
        %1138 = vmatmul.mubr.f32.gmra.mxu0 %v961
        %v1139 = vpop.f32.mrf.mxu0
        %v1140 = vadd.f32 1e-05, %v1139
        %v1141 = vpop.f32.mrf.mxu0
        %1142 = vmatprep.mubr.f32.mxu0 0.0
        %1143 = vmatmul.mubr.f32.gmra.mxu0 %v962
        %v1144 = vpop.f32.mrf.mxu0
        %v1145 = vadd.f32 1e-05, %v1144
        %v1146 = vpop.f32.mrf.mxu0
        %1147 = vmatprep.mubr.f32.mxu0 0.0
        %1148 = vmatmul.mubr.f32.gmra.mxu0 %v963
        %v1149 = vpop.f32.mrf.mxu0
        %v1150 = vadd.f32 1e-05, %v1149
        %v1151 = vpop.f32.mrf.mxu0
        %1152 = vmatprep.mubr.f32.mxu0 0.0
        %1153 = vmatmul.mubr.f32.gmra.mxu0 %v964
        %v1154 = vpop.f32.mrf.mxu0
        %v1155 = vadd.f32 1e-05, %v1154
        %v1156 = vpop.f32.mrf.mxu0
        %1157 = vmatprep.mubr.f32.mxu0 0.0
        %1158 = vmatmul.mubr.f32.gmra.mxu0 %v965
        %v1159 = vpop.f32.mrf.mxu0
        %v1160 = vadd.f32 1e-05, %v1159
        %v1161 = vpop.f32.mrf.mxu0
        %1162 = vmatprep.mubr.f32.mxu0 0.0
        %1163 = vmatmul.mubr.f32.gmra.mxu0 %v966
        %v1164 = vpop.f32.mrf.mxu0
        %v1165 = vadd.f32 1e-05, %v1164
        %v1166 = vpop.f32.mrf.mxu0
        %1167 = vmatprep.mubr.f32.mxu0 0.0
        %1168 = vmatmul.mubr.f32.gmra.mxu0 %v967
        %v1169 = vpop.f32.mrf.mxu0
        %v1170 = vadd.f32 1e-05, %v1169
        %v1171 = vpop.f32.mrf.mxu0
        %1172 = vmatprep.mubr.f32.mxu0 0.0
        %1173 = vmatmul.mubr.f32.gmra.mxu0 %v968
        %v1174 = vpop.f32.mrf.mxu0
        %v1175 = vadd.f32 1e-05, %v1174
        %v1176 = vpop.f32.mrf.mxu0
        %1177 = vmatprep.mubr.f32.mxu0 0.0
        %1178 = vmatmul.mubr.f32.gmra.mxu0 %v969
        %v1179 = vpop.f32.mrf.mxu0
        %v1180 = vadd.f32 1e-05, %v1179
        %v1181 = vpop.f32.mrf.mxu0
        %1182 = vmatprep.mubr.f32.mxu0 0.0
        %1183 = vmatmul.mubr.f32.gmra.mxu0 %v970
        %v1184 = vpop.f32.mrf.mxu0
        %v1185 = vadd.f32 1e-05, %v1184
        %v1186 = vpop.f32.mrf.mxu0
        %1187 = vmatprep.mubr.f32.mxu0 0.0
        %1188 = vmatmul.mubr.f32.gmra.mxu0 %v971
        %v1189 = vpop.f32.mrf.mxu0
        %v1190 = vadd.f32 1e-05, %v1189
        %v1191 = vpop.f32.mrf.mxu0
        %1192 = vmatprep.mubr.f32.mxu0 0.0
        %1193 = vmatmul.mubr.f32.gmra.mxu0 %v972
        %v1194 = vpop.f32.mrf.mxu0
        %v1195 = vadd.f32 1e-05, %v1194
        %v1196 = vpop.f32.mrf.mxu0
        %1197 = vmatprep.mubr.f32.mxu0 0.0
        %1198 = vmatmul.mubr.f32.gmra.mxu0 %v973
        %v1199 = vpop.f32.mrf.mxu0
        %v1200 = vadd.f32 1e-05, %v1199
        %v1201 = vpop.f32.mrf.mxu0
        %1202 = vmatprep.mubr.f32.mxu0 0.0
        %1203 = vmatmul.mubr.f32.gmra.mxu0 %v974
        %v1204 = vpop.f32.mrf.mxu0
        %v1205 = vadd.f32 1e-05, %v1204
        %v1206 = vpop.f32.mrf.mxu0
        %1207 = vmatprep.mubr.f32.mxu0 0.0
        %1208 = vmatmul.mubr.f32.gmra.mxu0 %v975
        %v1209 = vpop.f32.mrf.mxu0
        %v1210 = vadd.f32 1e-05, %v1209
        %v1211 = vpop.f32.mrf.mxu0
        %1212 = vmatprep.mubr.f32.mxu0 0.0
        %1213 = vmatmul.mubr.f32.gmra.mxu0 %v976
        %v1214 = vpop.f32.mrf.mxu0
        %v1215 = vadd.f32 1e-05, %v1214
        %v1216 = vpop.f32.mrf.mxu0
        %1217 = vmatprep.mubr.f32.mxu0 0.0
        %1218 = vmatmul.mubr.f32.gmra.mxu0 %v977
        %v1219 = vpop.f32.mrf.mxu0
        %v1220 = vadd.f32 1e-05, %v1219
        %v1221 = vpop.f32.mrf.mxu0
        %1222 = vmatprep.mubr.f32.mxu0 0.0
        %1223 = vmatmul.mubr.f32.gmra.mxu0 %v978
        %v1224 = vpop.f32.mrf.mxu0
        %v1225 = vadd.f32 1e-05, %v1224
        %v1226 = vpop.f32.mrf.mxu0
        %1227 = vmatprep.mubr.f32.mxu0 0.0
        %1228 = vmatmul.mubr.f32.gmra.mxu0 %v979
        %v1229 = vpop.f32.mrf.mxu0
        %v1230 = vadd.f32 1e-05, %v1229
        %v1231 = vpop.f32.mrf.mxu0
        %1232 = vmatprep.mubr.f32.mxu0 0.0
        %1233 = vmatmul.mubr.f32.gmra.mxu0 %v980
        %v1234 = vpop.f32.mrf.mxu0
        %v1235 = vadd.f32 1e-05, %v1234
        %v1236 = vpop.f32.mrf.mxu0
        %1237 = vmatprep.mubr.f32.mxu0 0.0
        %1238 = vmatmul.mubr.f32.gmra.mxu0 %v981
        %v1239 = vpop.f32.mrf.mxu0
        %v1240 = vadd.f32 1e-05, %v1239
        %v1241 = vpop.f32.mrf.mxu0
        %1242 = vmatprep.mubr.f32.mxu0 0.0
        %1243 = vmatmul.mubr.f32.gmra.mxu0 %v982
        %v1244 = vpop.f32.mrf.mxu0
        %v1245 = vadd.f32 1e-05, %v1244
        %v1246 = vpop.f32.mrf.mxu0
        %1247 = vmatprep.mubr.f32.mxu0 0.0
        %1248 = vmatmul.mubr.f32.gmra.mxu0 %v983
        %v1249 = vpop.f32.mrf.mxu0
        %v1250 = vadd.f32 1e-05, %v1249
        %v1251 = vpop.f32.mrf.mxu0
        %1252 = vmatprep.mubr.f32.mxu0 0.0
        %1253 = vmatmul.mubr.f32.gmra.mxu0 %v984
        %v1254 = vpop.f32.mrf.mxu0
        %v1255 = vadd.f32 1e-05, %v1254
        %v1256 = vpop.f32.mrf.mxu0
        %1257 = vmatprep.mubr.f32.mxu0 0.0
        %1258 = vmatmul.mubr.f32.gmra.mxu0 %v985
        %v1259 = vpop.f32.mrf.mxu0
        %v1260 = vadd.f32 1e-05, %v1259
        %v1261 = vpop.f32.mrf.mxu0
        %1262 = vmatprep.mubr.f32.mxu0 0.0
        %1263 = vmatmul.mubr.f32.gmra.mxu0 %v986
        %v1264 = vpop.f32.mrf.mxu0
        %v1265 = vadd.f32 1e-05, %v1264
        %v1266 = vpop.f32.mrf.mxu0
        %1267 = vmatprep.mubr.f32.mxu0 0.0
        %1268 = vmatmul.mubr.f32.gmra.mxu0 %v987
        %v1269 = vpop.f32.mrf.mxu0
        %v1270 = vadd.f32 1e-05, %v1269
        %v1271 = vpop.f32.mrf.mxu0
        %1272 = vmatprep.mubr.f32.mxu0 0.0
        %1273 = vmatmul.mubr.f32.gmra.mxu0 %v988
        %v1274 = vpop.f32.mrf.mxu0
        %v1275 = vadd.f32 1e-05, %v1274
        %v1276 = vpop.f32.mrf.mxu0
        %1277 = vmatprep.mubr.f32.mxu0 0.0
        %1278 = vmatmul.mubr.f32.gmra.mxu0 %v989
        %v1279 = vpop.f32.mrf.mxu0
        %v1280 = vadd.f32 1e-05, %v1279
        %v1281 = vpop.f32.mrf.mxu0
        %1282 = vmatprep.mubr.f32.mxu0 0.0
        %1283 = vmatmul.mubr.f32.gmra.mxu0 %v990
        %v1284 = vpop.f32.mrf.mxu0
        %v1285 = vadd.f32 1e-05, %v1284
        %v1286 = vpop.f32.mrf.mxu0
        %1287 = vmatprep.mubr.f32.mxu0 0.0
        %1288 = vmatmul.mubr.f32.gmra.mxu0 %v991
        %v1289 = vpop.f32.mrf.mxu0
        %v1290 = vadd.f32 1e-05, %v1289
        %v1291 = vpop.f32.mrf.mxu0
        %1292 = vmatprep.mubr.f32.mxu0 0.0
        %1293 = vmatmul.mubr.f32.gmra.mxu0 %v992
        %v1294 = vpop.f32.mrf.mxu0
        %v1295 = vadd.f32 1e-05, %v1294
        %v1296 = vpop.f32.mrf.mxu0
        %1297 = vmatprep.mubr.f32.mxu0 0.0
        %1298 = vmatmul.mubr.f32.gmra.mxu0 %v993
        %v1299 = vpop.f32.mrf.mxu0
        %v1300 = vadd.f32 1e-05, %v1299
        %v1301 = vpop.f32.mrf.mxu0
        %1302 = vmatprep.mubr.f32.mxu0 0.0
        %1303 = vmatmul.mubr.f32.gmra.mxu0 %v994
        %v1304 = vpop.f32.mrf.mxu0
        %v1305 = vadd.f32 1e-05, %v1304
        %v1306 = vpop.f32.mrf.mxu0
        %1307 = vmatprep.mubr.f32.mxu0 0.0
        %1308 = vmatmul.mubr.f32.gmra.mxu0 %v995
        %v1309 = vpop.f32.mrf.mxu0
        %v1310 = vadd.f32 1e-05, %v1309
        %v1311 = vpop.f32.mrf.mxu0
        %1312 = vmatprep.mubr.f32.mxu0 0.0
        %1313 = vmatmul.mubr.f32.gmra.mxu0 %v996
        %v1314 = vpop.f32.mrf.mxu0
        %v1315 = vadd.f32 1e-05, %v1314
        %v1316 = vpop.f32.mrf.mxu0
        %1317 = vmatprep.mubr.f32.mxu0 0.0
        %1318 = vmatmul.mubr.f32.gmra.mxu0 %v997
        %v1319 = vpop.f32.mrf.mxu0
        %v1320 = vadd.f32 1e-05, %v1319
        %v1321 = vpop.f32.mrf.mxu0
        %1322 = vmatprep.mubr.f32.mxu0 0.0
        %1323 = vmatmul.mubr.f32.gmra.mxu0 %v998
        %v1324 = vpop.f32.mrf.mxu0
        %v1325 = vadd.f32 1e-05, %v1324
        %v1326 = vpop.f32.mrf.mxu0
        %1327 = vmatprep.mubr.f32.mxu0 0.0
        %1328 = vmatmul.mubr.f32.gmra.mxu0 %v999
        %v1329 = vpop.f32.mrf.mxu0
        %v1330 = vadd.f32 1e-05, %v1329
        %v1331 = vpop.f32.mrf.mxu0
        %1332 = vmatprep.mubr.f32.mxu0 0.0
        %1333 = vmatmul.mubr.f32.gmra.mxu0 %v1000
        %v1334 = vpop.f32.mrf.mxu0
        %v1335 = vadd.f32 1e-05, %v1334
        %v1336 = vpop.f32.mrf.mxu0
        %1337 = vmatprep.mubr.f32.mxu0 0.0
        %1338 = vmatmul.mubr.f32.gmra.mxu0 %v1001
        %v1339 = vpop.f32.mrf.mxu0
        %v1340 = vadd.f32 1e-05, %v1339
        %v1341 = vpop.f32.mrf.mxu0
        %1342 = vmatprep.mubr.f32.mxu0 0.0
        %1343 = vmatmul.mubr.f32.gmra.mxu0 %v1002
        %v1344 = vpop.f32.mrf.mxu0
        %v1345 = vadd.f32 1e-05, %v1344
        %v1346 = vpop.f32.mrf.mxu0
        %1347 = vmatprep.mubr.f32.mxu0 0.0
        %1348 = vmatmul.mubr.f32.gmra.mxu0 %v1003
        %v1349 = vpop.f32.mrf.mxu0
        %v1350 = vadd.f32 1e-05, %v1349
        %v1351 = vpop.f32.mrf.mxu0
        %1352 = vmatprep.mubr.f32.mxu0 0.0
        %1353 = vmatmul.mubr.f32.gmra.mxu0 %v1004
        %v1354 = vpop.f32.mrf.mxu0
        %v1355 = vadd.f32 1e-05, %v1354
        %v1356 = vpop.f32.mrf.mxu0
        %1357 = vmatprep.mubr.f32.mxu0 0.0
        %1358 = vmatmul.mubr.f32.gmra.mxu0 %v1005
        %v1359 = vpop.f32.mrf.mxu0
        %v1360 = vadd.f32 1e-05, %v1359
        %v1361 = vpop.f32.mrf.mxu0
        %1362 = vmatprep.mubr.f32.mxu0 0.0
        %1363 = vmatmul.mubr.f32.gmra.mxu0 %v1006
        %v1364 = vpop.f32.mrf.mxu0
        %v1365 = vadd.f32 1e-05, %v1364
        %v1366 = vpop.f32.mrf.mxu0
        %1367 = vmatprep.mubr.f32.mxu0 0.0
        %1368 = vmatmul.mubr.f32.gmra.mxu0 %v1007
        %v1369 = vpop.f32.mrf.mxu0
        %v1370 = vadd.f32 1e-05, %v1369
        %v1371 = vpop.f32.mrf.mxu0
        %1372 = vmatprep.mubr.f32.mxu0 0.0
        %1373 = vmatmul.mubr.f32.gmra.mxu0 %v1008
        %v1374 = vpop.f32.mrf.mxu0
        %v1375 = vadd.f32 1e-05, %v1374
        %v1376 = vpop.f32.mrf.mxu0
        %1377 = vmatprep.mubr.f32.mxu0 0.0
        %1378 = vmatmul.mubr.f32.gmra.mxu0 %v1009
        %v1379 = vpop.f32.mrf.mxu0
        %v1380 = vadd.f32 1e-05, %v1379
        %v1381 = vpop.f32.mrf.mxu0
        %1382 = vmatprep.mubr.f32.mxu0 0.0
        %1383 = vmatmul.mubr.f32.gmra.mxu0 %v1010
        %v1384 = vpop.f32.mrf.mxu0
        %v1385 = vadd.f32 1e-05, %v1384
        %v1386 = vpop.f32.mrf.mxu0
        %1387 = vmatprep.mubr.f32.mxu0 0.0
        %1388 = vmatmul.mubr.f32.gmra.mxu0 %v1011
        %v1389 = vpop.f32.mrf.mxu0
        %v1390 = vadd.f32 1e-05, %v1389
        %v1391 = vpop.f32.mrf.mxu0
        %1392 = vmatprep.mubr.f32.mxu0 0.0
        %1393 = vmatmul.mubr.f32.gmra.mxu0 %v1012
        %v1394 = vpop.f32.mrf.mxu0
        %v1395 = vadd.f32 1e-05, %v1394
        %v1396 = vpop.f32.mrf.mxu0
        %1397 = vmatprep.mubr.f32.mxu0 0.0
        %1398 = vmatmul.mubr.f32.gmra.mxu0 %v1013
        %v1399 = vpop.f32.mrf.mxu0
        %v1400 = vadd.f32 1e-05, %v1399
        %v1401 = vpop.f32.mrf.mxu0
        %1402 = vmatprep.mubr.f32.mxu0 0.0
        %1403 = vmatmul.mubr.f32.gmra.mxu0 %v1014
        %v1404 = vpop.f32.mrf.mxu0
        %v1405 = vadd.f32 1e-05, %v1404
        %v1406 = vpop.f32.mrf.mxu0
        %1407 = vmatprep.mubr.f32.mxu0 0.0
        %1408 = vmatmul.mubr.f32.gmra.mxu0 %v1015
        %v1409 = vpop.f32.mrf.mxu0
        %v1410 = vadd.f32 1e-05, %v1409
        %v1411 = vpop.f32.mrf.mxu0
        %1412 = vmatprep.mubr.f32.mxu0 0.0
        %1413 = vmatmul.mubr.f32.gmra.mxu0 %v1016
        %v1414 = vpop.f32.mrf.mxu0
        %v1415 = vadd.f32 1e-05, %v1414
        %v1416 = vpop.f32.mrf.mxu0
        %1417 = vdwg.mxu0
        %v1418 = vrsqrt.pop %v1100
        %v1419 = vrsqrt.pop %v1105
        %v1420 = vrsqrt.pop %v1110
        %v1421 = vrsqrt.pop %v1115
        %v1422 = vrsqrt.pop %v1120
        %v1423 = vrsqrt.pop %v1125
        %v1424 = vrsqrt.pop %v1130
        %v1425 = vrsqrt.pop %v1135
        %v1426 = vrsqrt.pop %v1140
        %v1427 = vrsqrt.pop %v1145
        %v1428 = vrsqrt.pop %v1150
        %v1429 = vrsqrt.pop %v1155
        %v1430 = vrsqrt.pop %v1160
        %v1431 = vrsqrt.pop %v1165
        %v1432 = vrsqrt.pop %v1170
        %v1433 = vrsqrt.pop %v1175
        %v1434 = vrsqrt.pop %v1180
        %v1435 = vrsqrt.pop %v1185
        %v1436 = vrsqrt.pop %v1190
        %v1437 = vrsqrt.pop %v1195
        %v1438 = vrsqrt.pop %v1200
        %v1439 = vrsqrt.pop %v1205
        %v1440 = vrsqrt.pop %v1210
        %v1441 = vrsqrt.pop %v1215
        %v1442 = vrsqrt.pop %v1220
        %v1443 = vrsqrt.pop %v1225
        %v1444 = vrsqrt.pop %v1230
        %v1445 = vrsqrt.pop %v1235
        %v1446 = vrsqrt.pop %v1240
        %v1447 = vrsqrt.pop %v1245
        %v1448 = vrsqrt.pop %v1250
        %v1449 = vrsqrt.pop %v1255
        %v1450 = vrsqrt.pop %v1260
        %v1451 = vrsqrt.pop %v1265
        %v1452 = vrsqrt.pop %v1270
        %v1453 = vrsqrt.pop %v1275
        %v1454 = vrsqrt.pop %v1280
        %v1455 = vrsqrt.pop %v1285
        %v1456 = vrsqrt.pop %v1290
        %v1457 = vrsqrt.pop %v1295
        %v1458 = vrsqrt.pop %v1300
        %v1459 = vrsqrt.pop %v1305
        %v1460 = vrsqrt.pop %v1310
        %v1461 = vrsqrt.pop %v1315
        %v1462 = vrsqrt.pop %v1320
        %v1463 = vrsqrt.pop %v1325
        %v1464 = vrsqrt.pop %v1330
        %v1465 = vrsqrt.pop %v1335
        %v1466 = vrsqrt.pop %v1340
        %v1467 = vrsqrt.pop %v1345
        %v1468 = vrsqrt.pop %v1350
        %v1469 = vrsqrt.pop %v1355
        %v1470 = vrsqrt.pop %v1360
        %v1471 = vrsqrt.pop %v1365
        %v1472 = vrsqrt.pop %v1370
        %v1473 = vrsqrt.pop %v1375
        %v1474 = vrsqrt.pop %v1380
        %v1475 = vrsqrt.pop %v1385
        %v1476 = vrsqrt.pop %v1390
        %v1477 = vrsqrt.pop %v1395
        %v1478 = vrsqrt.pop %v1400
        %v1479 = vrsqrt.pop %v1405
        %v1480 = vrsqrt.pop %v1410
        %v1481 = vrsqrt.pop %v1415
        %v1482 = vld [vmem:[#allocation5] sm:$0xf]
        %vm1483 = vcmask 31744
        %v1485 = vsel %vm1483, %v1418, 0
        %v1488 = vsel %vm1483, %v1419, 0
        %v1491 = vsel %vm1483, %v1420, 0
        %v1494 = vsel %vm1483, %v1421, 0
        %v1497 = vsel %vm1483, %v1422, 0
        %v1500 = vsel %vm1483, %v1423, 0
        %v1503 = vsel %vm1483, %v1424, 0
        %v1506 = vsel %vm1483, %v1425, 0
        %v1509 = vsel %vm1483, %v1426, 0
        %v1512 = vsel %vm1483, %v1427, 0
        %v1515 = vsel %vm1483, %v1428, 0
        %v1518 = vsel %vm1483, %v1429, 0
        %v1521 = vsel %vm1483, %v1430, 0
        %v1524 = vsel %vm1483, %v1431, 0
        %v1527 = vsel %vm1483, %v1432, 0
        %v1530 = vsel %vm1483, %v1433, 0
        %v1533 = vsel %vm1483, %v1434, 0
        %v1536 = vsel %vm1483, %v1435, 0
        %v1539 = vsel %vm1483, %v1436, 0
        %v1542 = vsel %vm1483, %v1437, 0
        %v1545 = vsel %vm1483, %v1438, 0
        %v1548 = vsel %vm1483, %v1439, 0
        %v1551 = vsel %vm1483, %v1440, 0
        %v1554 = vsel %vm1483, %v1441, 0
        %v1557 = vsel %vm1483, %v1442, 0
        %v1560 = vsel %vm1483, %v1443, 0
        %v1563 = vsel %vm1483, %v1444, 0
        %v1566 = vsel %vm1483, %v1445, 0
        %v1569 = vsel %vm1483, %v1446, 0
        %v1572 = vsel %vm1483, %v1447, 0
        %v1575 = vsel %vm1483, %v1448, 0
        %v1578 = vsel %vm1483, %v1449, 0
        %v1581 = vsel %vm1483, %v1450, 0
        %v1584 = vsel %vm1483, %v1451, 0
        %v1587 = vsel %vm1483, %v1452, 0
        %v1590 = vsel %vm1483, %v1453, 0
        %v1593 = vsel %vm1483, %v1454, 0
        %v1596 = vsel %vm1483, %v1455, 0
        %v1599 = vsel %vm1483, %v1456, 0
        %v1602 = vsel %vm1483, %v1457, 0
        %v1605 = vsel %vm1483, %v1458, 0
        %v1608 = vsel %vm1483, %v1459, 0
        %v1611 = vsel %vm1483, %v1460, 0
        %v1614 = vsel %vm1483, %v1461, 0
        %v1617 = vsel %vm1483, %v1462, 0
        %v1620 = vsel %vm1483, %v1463, 0
        %v1623 = vsel %vm1483, %v1464, 0
        %v1626 = vsel %vm1483, %v1465, 0
        %v1629 = vsel %vm1483, %v1466, 0
        %v1632 = vsel %vm1483, %v1467, 0
        %v1635 = vsel %vm1483, %v1468, 0
        %v1638 = vsel %vm1483, %v1469, 0
        %v1641 = vsel %vm1483, %v1470, 0
        %v1644 = vsel %vm1483, %v1471, 0
        %v1647 = vsel %vm1483, %v1472, 0
        %v1650 = vsel %vm1483, %v1473, 0
        %v1653 = vsel %vm1483, %v1474, 0
        %v1656 = vsel %vm1483, %v1475, 0
        %v1659 = vsel %vm1483, %v1476, 0
        %v1662 = vsel %vm1483, %v1477, 0
        %v1665 = vsel %vm1483, %v1478, 0
        %v1668 = vsel %vm1483, %v1479, 0
        %v1671 = vsel %vm1483, %v1480, 0
        %v1674 = vsel %vm1483, %v1481, 0
        %vm1676 = vcmask 1043456
        %v1678 = vsel %vm1676, %v1482, 0
        %1680 = vmatprep.subr.mxu0 0.0
        %1681 = vmatpush1.msra.mxu0 0.0
        %1682 = vmatprep.subr.mxu0 0.0
        %1683 = vmatpush1.msra.mxu0 0.0
        %1684 = vmatprep.subr.mxu0 0.0
        %1685 = vmatpush1.msra.mxu0 0.0
        %1686 = vmatprep.subr.mxu0 0.0
        %1687 = vmatpush1.msra.mxu0 0.0
        %1688 = vmatprep.subr.mxu0 0.0
        %1689 = vmatpush1.msra.mxu0 0.0
        %1690 = vmatprep.subr.mxu0 0.0
        %1691 = vmatpush1.msra.mxu0 0.0
        %1692 = vmatprep.subr.mxu0 0.0
        %1693 = vmatpush1.msra.mxu0 0.0
        %1694 = vmatprep.subr.mxu0 0.0
        %1695 = vmatpush1.msra.mxu0 0.0
        %1696 = vmatprep.subr.mxu0 0.0
        %1697 = vmatpush1.msra.mxu0 0.0
        %1698 = vmatprep.subr.mxu0 0.0
        %1699 = vmatpush1.msra.mxu0 0.0
        %1700 = vmatprep.subr.mxu0 0.0
        %1701 = vmatpush1.msra.mxu0 0.0
        %1702 = vmatprep.subr.mxu0 0.0
        %1703 = vmatpush1.msra.mxu0 0.0
        %1704 = vmatprep.subr.mxu0 0.0
        %1705 = vmatpush1.msra.mxu0 0.0
        %1706 = vmatprep.subr.mxu0 0.0
        %1707 = vmatpush1.msra.mxu0 0.0
        %1708 = vmatprep.subr.mxu0 0.0
        %1709 = vmatpush1.msra.mxu0 0.0
        %1710 = vmatprep.subr.mxu0 0.0
        %1711 = vmatpush1.msra.mxu0 %v1678
        %1712 = vmatprep.subr.mxu0 0.0
        %1713 = vmatpush2.msra.mxu0 0.0
        %1714 = vmatprep.subr.mxu0 0.0
        %1715 = vmatpush2.msra.mxu0 0.0
        %1716 = vmatprep.subr.mxu0 0.0
        %1717 = vmatpush2.msra.mxu0 0.0
        %1718 = vmatprep.subr.mxu0 0.0
        %1719 = vmatpush2.msra.mxu0 0.0
        %1720 = vmatprep.subr.mxu0 0.0
        %1721 = vmatpush2.msra.mxu0 0.0
        %1722 = vmatprep.subr.mxu0 0.0
        %1723 = vmatpush2.msra.mxu0 0.0
        %1724 = vmatprep.subr.mxu0 0.0
        %1725 = vmatpush2.msra.mxu0 0.0
        %1726 = vmatprep.subr.mxu0 0.0
        %1727 = vmatpush2.msra.mxu0 0.0
        %1728 = vmatprep.subr.mxu0 0.0
        %1729 = vmatpush2.msra.mxu0 0.0
        %1730 = vmatprep.subr.mxu0 0.0
        %1731 = vmatpush2.msra.mxu0 0.0
        %1732 = vmatprep.subr.mxu0 0.0
        %1733 = vmatpush2.msra.mxu0 0.0
        %1734 = vmatprep.subr.mxu0 0.0
        %1735 = vmatpush2.msra.mxu0 0.0
        %1736 = vmatprep.subr.mxu0 0.0
        %1737 = vmatpush2.msra.mxu0 0.0
        %1738 = vmatprep.subr.mxu0 0.0
        %1739 = vmatpush2.msra.mxu0 0.0
        %1740 = vmatprep.subr.mxu0 0.0
        %1741 = vmatpush2.msra.mxu0 0.0
        %1742 = vmatprep.subr.mxu0 0.0
        %1743 = vmatpush2.msra.mxu0 0.0
        %1744 = vmatprep.mubr.f32.mxu0 0.0
        %1745 = vmatmul.mubr.f32.gmra.mxu0 %v1485
        %v1746 = vpop.f32.mrf.mxu0
        %v1747 = vadd.f32 0.0, %v1746
        %v1748 = vpop.f32.mrf.mxu0
        %1749 = vmatprep.mubr.f32.mxu0 0.0
        %1750 = vmatmul.mubr.f32.gmra.mxu0 %v1488
        %v1751 = vpop.f32.mrf.mxu0
        %v1752 = vadd.f32 0.0, %v1751
        %v1753 = vpop.f32.mrf.mxu0
        %1754 = vmatprep.mubr.f32.mxu0 0.0
        %1755 = vmatmul.mubr.f32.gmra.mxu0 %v1491
        %v1756 = vpop.f32.mrf.mxu0
        %v1757 = vadd.f32 0.0, %v1756
        %v1758 = vpop.f32.mrf.mxu0
        %1759 = vmatprep.mubr.f32.mxu0 0.0
        %1760 = vmatmul.mubr.f32.gmra.mxu0 %v1494
        %v1761 = vpop.f32.mrf.mxu0
        %v1762 = vadd.f32 0.0, %v1761
        %v1763 = vpop.f32.mrf.mxu0
        %1764 = vmatprep.mubr.f32.mxu0 0.0
        %1765 = vmatmul.mubr.f32.gmra.mxu0 %v1497
        %v1766 = vpop.f32.mrf.mxu0
        %v1767 = vadd.f32 0.0, %v1766
        %v1768 = vpop.f32.mrf.mxu0
        %1769 = vmatprep.mubr.f32.mxu0 0.0
        %1770 = vmatmul.mubr.f32.gmra.mxu0 %v1500
        %v1771 = vpop.f32.mrf.mxu0
        %v1772 = vadd.f32 0.0, %v1771
        %v1773 = vpop.f32.mrf.mxu0
        %1774 = vmatprep.mubr.f32.mxu0 0.0
        %1775 = vmatmul.mubr.f32.gmra.mxu0 %v1503
        %v1776 = vpop.f32.mrf.mxu0
        %v1777 = vadd.f32 0.0, %v1776
        %v1778 = vpop.f32.mrf.mxu0
        %1779 = vmatprep.mubr.f32.mxu0 0.0
        %1780 = vmatmul.mubr.f32.gmra.mxu0 %v1506
        %v1781 = vpop.f32.mrf.mxu0
        %v1782 = vadd.f32 0.0, %v1781
        %v1783 = vpop.f32.mrf.mxu0
        %1784 = vmatprep.mubr.f32.mxu0 0.0
        %1785 = vmatmul.mubr.f32.gmra.mxu0 %v1509
        %v1786 = vpop.f32.mrf.mxu0
        %v1787 = vadd.f32 0.0, %v1786
        %v1788 = vpop.f32.mrf.mxu0
        %1789 = vmatprep.mubr.f32.mxu0 0.0
        %1790 = vmatmul.mubr.f32.gmra.mxu0 %v1512
        %v1791 = vpop.f32.mrf.mxu0
        %v1792 = vadd.f32 0.0, %v1791
        %v1793 = vpop.f32.mrf.mxu0
        %1794 = vmatprep.mubr.f32.mxu0 0.0
        %1795 = vmatmul.mubr.f32.gmra.mxu0 %v1515
        %v1796 = vpop.f32.mrf.mxu0
        %v1797 = vadd.f32 0.0, %v1796
        %v1798 = vpop.f32.mrf.mxu0
        %1799 = vmatprep.mubr.f32.mxu0 0.0
        %1800 = vmatmul.mubr.f32.gmra.mxu0 %v1518
        %v1801 = vpop.f32.mrf.mxu0
        %v1802 = vadd.f32 0.0, %v1801
        %v1803 = vpop.f32.mrf.mxu0
        %1804 = vmatprep.mubr.f32.mxu0 0.0
        %1805 = vmatmul.mubr.f32.gmra.mxu0 %v1521
        %v1806 = vpop.f32.mrf.mxu0
        %v1807 = vadd.f32 0.0, %v1806
        %v1808 = vpop.f32.mrf.mxu0
        %1809 = vmatprep.mubr.f32.mxu0 0.0
        %1810 = vmatmul.mubr.f32.gmra.mxu0 %v1524
        %v1811 = vpop.f32.mrf.mxu0
        %v1812 = vadd.f32 0.0, %v1811
        %v1813 = vpop.f32.mrf.mxu0
        %1814 = vmatprep.mubr.f32.mxu0 0.0
        %1815 = vmatmul.mubr.f32.gmra.mxu0 %v1527
        %v1816 = vpop.f32.mrf.mxu0
        %v1817 = vadd.f32 0.0, %v1816
        %v1818 = vpop.f32.mrf.mxu0
        %1819 = vmatprep.mubr.f32.mxu0 0.0
        %1820 = vmatmul.mubr.f32.gmra.mxu0 %v1530
        %v1821 = vpop.f32.mrf.mxu0
        %v1822 = vadd.f32 0.0, %v1821
        %v1823 = vpop.f32.mrf.mxu0
        %1824 = vmatprep.mubr.f32.mxu0 0.0
        %1825 = vmatmul.mubr.f32.gmra.mxu0 %v1533
        %v1826 = vpop.f32.mrf.mxu0
        %v1827 = vadd.f32 0.0, %v1826
        %v1828 = vpop.f32.mrf.mxu0
        %1829 = vmatprep.mubr.f32.mxu0 0.0
        %1830 = vmatmul.mubr.f32.gmra.mxu0 %v1536
        %v1831 = vpop.f32.mrf.mxu0
        %v1832 = vadd.f32 0.0, %v1831
        %v1833 = vpop.f32.mrf.mxu0
        %1834 = vmatprep.mubr.f32.mxu0 0.0
        %1835 = vmatmul.mubr.f32.gmra.mxu0 %v1539
        %v1836 = vpop.f32.mrf.mxu0
        %v1837 = vadd.f32 0.0, %v1836
        %v1838 = vpop.f32.mrf.mxu0
        %1839 = vmatprep.mubr.f32.mxu0 0.0
        %1840 = vmatmul.mubr.f32.gmra.mxu0 %v1542
        %v1841 = vpop.f32.mrf.mxu0
        %v1842 = vadd.f32 0.0, %v1841
        %v1843 = vpop.f32.mrf.mxu0
        %1844 = vmatprep.mubr.f32.mxu0 0.0
        %1845 = vmatmul.mubr.f32.gmra.mxu0 %v1545
        %v1846 = vpop.f32.mrf.mxu0
        %v1847 = vadd.f32 0.0, %v1846
        %v1848 = vpop.f32.mrf.mxu0
        %1849 = vmatprep.mubr.f32.mxu0 0.0
        %1850 = vmatmul.mubr.f32.gmra.mxu0 %v1548
        %v1851 = vpop.f32.mrf.mxu0
        %v1852 = vadd.f32 0.0, %v1851
        %v1853 = vpop.f32.mrf.mxu0
        %1854 = vmatprep.mubr.f32.mxu0 0.0
        %1855 = vmatmul.mubr.f32.gmra.mxu0 %v1551
        %v1856 = vpop.f32.mrf.mxu0
        %v1857 = vadd.f32 0.0, %v1856
        %v1858 = vpop.f32.mrf.mxu0
        %1859 = vmatprep.mubr.f32.mxu0 0.0
        %1860 = vmatmul.mubr.f32.gmra.mxu0 %v1554
        %v1861 = vpop.f32.mrf.mxu0
        %v1862 = vadd.f32 0.0, %v1861
        %v1863 = vpop.f32.mrf.mxu0
        %1864 = vmatprep.mubr.f32.mxu0 0.0
        %1865 = vmatmul.mubr.f32.gmra.mxu0 %v1557
        %v1866 = vpop.f32.mrf.mxu0
        %v1867 = vadd.f32 0.0, %v1866
        %v1868 = vpop.f32.mrf.mxu0
        %1869 = vmatprep.mubr.f32.mxu0 0.0
        %1870 = vmatmul.mubr.f32.gmra.mxu0 %v1560
        %v1871 = vpop.f32.mrf.mxu0
        %v1872 = vadd.f32 0.0, %v1871
        %v1873 = vpop.f32.mrf.mxu0
        %1874 = vmatprep.mubr.f32.mxu0 0.0
        %1875 = vmatmul.mubr.f32.gmra.mxu0 %v1563
        %v1876 = vpop.f32.mrf.mxu0
        %v1877 = vadd.f32 0.0, %v1876
        %v1878 = vpop.f32.mrf.mxu0
        %1879 = vmatprep.mubr.f32.mxu0 0.0
        %1880 = vmatmul.mubr.f32.gmra.mxu0 %v1566
        %v1881 = vpop.f32.mrf.mxu0
        %v1882 = vadd.f32 0.0, %v1881
        %v1883 = vpop.f32.mrf.mxu0
        %1884 = vmatprep.mubr.f32.mxu0 0.0
        %1885 = vmatmul.mubr.f32.gmra.mxu0 %v1569
        %v1886 = vpop.f32.mrf.mxu0
        %v1887 = vadd.f32 0.0, %v1886
        %v1888 = vpop.f32.mrf.mxu0
        %1889 = vmatprep.mubr.f32.mxu0 0.0
        %1890 = vmatmul.mubr.f32.gmra.mxu0 %v1572
        %v1891 = vpop.f32.mrf.mxu0
        %v1892 = vadd.f32 0.0, %v1891
        %v1893 = vpop.f32.mrf.mxu0
        %1894 = vmatprep.mubr.f32.mxu0 0.0
        %1895 = vmatmul.mubr.f32.gmra.mxu0 %v1575
        %v1896 = vpop.f32.mrf.mxu0
        %v1897 = vadd.f32 0.0, %v1896
        %v1898 = vpop.f32.mrf.mxu0
        %1899 = vmatprep.mubr.f32.mxu0 0.0
        %1900 = vmatmul.mubr.f32.gmra.mxu0 %v1578
        %v1901 = vpop.f32.mrf.mxu0
        %v1902 = vadd.f32 0.0, %v1901
        %v1903 = vpop.f32.mrf.mxu0
        %1904 = vmatprep.mubr.f32.mxu0 0.0
        %1905 = vmatmul.mubr.f32.gmra.mxu0 %v1581
        %v1906 = vpop.f32.mrf.mxu0
        %v1907 = vadd.f32 0.0, %v1906
        %v1908 = vpop.f32.mrf.mxu0
        %1909 = vmatprep.mubr.f32.mxu0 0.0
        %1910 = vmatmul.mubr.f32.gmra.mxu0 %v1584
        %v1911 = vpop.f32.mrf.mxu0
        %v1912 = vadd.f32 0.0, %v1911
        %v1913 = vpop.f32.mrf.mxu0
        %1914 = vmatprep.mubr.f32.mxu0 0.0
        %1915 = vmatmul.mubr.f32.gmra.mxu0 %v1587
        %v1916 = vpop.f32.mrf.mxu0
        %v1917 = vadd.f32 0.0, %v1916
        %v1918 = vpop.f32.mrf.mxu0
        %1919 = vmatprep.mubr.f32.mxu0 0.0
        %1920 = vmatmul.mubr.f32.gmra.mxu0 %v1590
        %v1921 = vpop.f32.mrf.mxu0
        %v1922 = vadd.f32 0.0, %v1921
        %v1923 = vpop.f32.mrf.mxu0
        %1924 = vmatprep.mubr.f32.mxu0 0.0
        %1925 = vmatmul.mubr.f32.gmra.mxu0 %v1593
        %v1926 = vpop.f32.mrf.mxu0
        %v1927 = vadd.f32 0.0, %v1926
        %v1928 = vpop.f32.mrf.mxu0
        %1929 = vmatprep.mubr.f32.mxu0 0.0
        %1930 = vmatmul.mubr.f32.gmra.mxu0 %v1596
        %v1931 = vpop.f32.mrf.mxu0
        %v1932 = vadd.f32 0.0, %v1931
        %v1933 = vpop.f32.mrf.mxu0
        %1934 = vmatprep.mubr.f32.mxu0 0.0
        %1935 = vmatmul.mubr.f32.gmra.mxu0 %v1599
        %v1936 = vpop.f32.mrf.mxu0
        %v1937 = vadd.f32 0.0, %v1936
        %v1938 = vpop.f32.mrf.mxu0
        %1939 = vmatprep.mubr.f32.mxu0 0.0
        %1940 = vmatmul.mubr.f32.gmra.mxu0 %v1602
        %v1941 = vpop.f32.mrf.mxu0
        %v1942 = vadd.f32 0.0, %v1941
        %v1943 = vpop.f32.mrf.mxu0
        %1944 = vmatprep.mubr.f32.mxu0 0.0
        %1945 = vmatmul.mubr.f32.gmra.mxu0 %v1605
        %v1946 = vpop.f32.mrf.mxu0
        %v1947 = vadd.f32 0.0, %v1946
        %v1948 = vpop.f32.mrf.mxu0
        %1949 = vmatprep.mubr.f32.mxu0 0.0
        %1950 = vmatmul.mubr.f32.gmra.mxu0 %v1608
        %v1951 = vpop.f32.mrf.mxu0
        %v1952 = vadd.f32 0.0, %v1951
        %v1953 = vpop.f32.mrf.mxu0
        %1954 = vmatprep.mubr.f32.mxu0 0.0
        %1955 = vmatmul.mubr.f32.gmra.mxu0 %v1611
        %v1956 = vpop.f32.mrf.mxu0
        %v1957 = vadd.f32 0.0, %v1956
        %v1958 = vpop.f32.mrf.mxu0
        %1959 = vmatprep.mubr.f32.mxu0 0.0
        %1960 = vmatmul.mubr.f32.gmra.mxu0 %v1614
        %v1961 = vpop.f32.mrf.mxu0
        %v1962 = vadd.f32 0.0, %v1961
        %v1963 = vpop.f32.mrf.mxu0
        %1964 = vmatprep.mubr.f32.mxu0 0.0
        %1965 = vmatmul.mubr.f32.gmra.mxu0 %v1617
        %v1966 = vpop.f32.mrf.mxu0
        %v1967 = vadd.f32 0.0, %v1966
        %v1968 = vpop.f32.mrf.mxu0
        %1969 = vmatprep.mubr.f32.mxu0 0.0
        %1970 = vmatmul.mubr.f32.gmra.mxu0 %v1620
        %v1971 = vpop.f32.mrf.mxu0
        %v1972 = vadd.f32 0.0, %v1971
        %v1973 = vpop.f32.mrf.mxu0
        %1974 = vmatprep.mubr.f32.mxu0 0.0
        %1975 = vmatmul.mubr.f32.gmra.mxu0 %v1623
        %v1976 = vpop.f32.mrf.mxu0
        %v1977 = vadd.f32 0.0, %v1976
        %v1978 = vpop.f32.mrf.mxu0
        %1979 = vmatprep.mubr.f32.mxu0 0.0
        %1980 = vmatmul.mubr.f32.gmra.mxu0 %v1626
        %v1981 = vpop.f32.mrf.mxu0
        %v1982 = vadd.f32 0.0, %v1981
        %v1983 = vpop.f32.mrf.mxu0
        %1984 = vmatprep.mubr.f32.mxu0 0.0
        %1985 = vmatmul.mubr.f32.gmra.mxu0 %v1629
        %v1986 = vpop.f32.mrf.mxu0
        %v1987 = vadd.f32 0.0, %v1986
        %v1988 = vpop.f32.mrf.mxu0
        %1989 = vmatprep.mubr.f32.mxu0 0.0
        %1990 = vmatmul.mubr.f32.gmra.mxu0 %v1632
        %v1991 = vpop.f32.mrf.mxu0
        %v1992 = vadd.f32 0.0, %v1991
        %v1993 = vpop.f32.mrf.mxu0
        %1994 = vmatprep.mubr.f32.mxu0 0.0
        %1995 = vmatmul.mubr.f32.gmra.mxu0 %v1635
        %v1996 = vpop.f32.mrf.mxu0
        %v1997 = vadd.f32 0.0, %v1996
        %v1998 = vpop.f32.mrf.mxu0
        %1999 = vmatprep.mubr.f32.mxu0 0.0
        %2000 = vmatmul.mubr.f32.gmra.mxu0 %v1638
        %v2001 = vpop.f32.mrf.mxu0
        %v2002 = vadd.f32 0.0, %v2001
        %v2003 = vpop.f32.mrf.mxu0
        %2004 = vmatprep.mubr.f32.mxu0 0.0
        %2005 = vmatmul.mubr.f32.gmra.mxu0 %v1641
        %v2006 = vpop.f32.mrf.mxu0
        %v2007 = vadd.f32 0.0, %v2006
        %v2008 = vpop.f32.mrf.mxu0
        %2009 = vmatprep.mubr.f32.mxu0 0.0
        %2010 = vmatmul.mubr.f32.gmra.mxu0 %v1644
        %v2011 = vpop.f32.mrf.mxu0
        %v2012 = vadd.f32 0.0, %v2011
        %v2013 = vpop.f32.mrf.mxu0
        %2014 = vmatprep.mubr.f32.mxu0 0.0
        %2015 = vmatmul.mubr.f32.gmra.mxu0 %v1647
        %v2016 = vpop.f32.mrf.mxu0
        %v2017 = vadd.f32 0.0, %v2016
        %v2018 = vpop.f32.mrf.mxu0
        %2019 = vmatprep.mubr.f32.mxu0 0.0
        %2020 = vmatmul.mubr.f32.gmra.mxu0 %v1650
        %v2021 = vpop.f32.mrf.mxu0
        %v2022 = vadd.f32 0.0, %v2021
        %v2023 = vpop.f32.mrf.mxu0
        %2024 = vmatprep.mubr.f32.mxu0 0.0
        %2025 = vmatmul.mubr.f32.gmra.mxu0 %v1653
        %v2026 = vpop.f32.mrf.mxu0
        %v2027 = vadd.f32 0.0, %v2026
        %v2028 = vpop.f32.mrf.mxu0
        %2029 = vmatprep.mubr.f32.mxu0 0.0
        %2030 = vmatmul.mubr.f32.gmra.mxu0 %v1656
        %v2031 = vpop.f32.mrf.mxu0
        %v2032 = vadd.f32 0.0, %v2031
        %v2033 = vpop.f32.mrf.mxu0
        %2034 = vmatprep.mubr.f32.mxu0 0.0
        %2035 = vmatmul.mubr.f32.gmra.mxu0 %v1659
        %v2036 = vpop.f32.mrf.mxu0
        %v2037 = vadd.f32 0.0, %v2036
        %v2038 = vpop.f32.mrf.mxu0
        %2039 = vmatprep.mubr.f32.mxu0 0.0
        %2040 = vmatmul.mubr.f32.gmra.mxu0 %v1662
        %v2041 = vpop.f32.mrf.mxu0
        %v2042 = vadd.f32 0.0, %v2041
        %v2043 = vpop.f32.mrf.mxu0
        %2044 = vmatprep.mubr.f32.mxu0 0.0
        %2045 = vmatmul.mubr.f32.gmra.mxu0 %v1665
        %v2046 = vpop.f32.mrf.mxu0
        %v2047 = vadd.f32 0.0, %v2046
        %v2048 = vpop.f32.mrf.mxu0
        %2049 = vmatprep.mubr.f32.mxu0 0.0
        %2050 = vmatmul.mubr.f32.gmra.mxu0 %v1668
        %v2051 = vpop.f32.mrf.mxu0
        %v2052 = vadd.f32 0.0, %v2051
        %v2053 = vpop.f32.mrf.mxu0
        %2054 = vmatprep.mubr.f32.mxu0 0.0
        %2055 = vmatmul.mubr.f32.gmra.mxu0 %v1671
        %v2056 = vpop.f32.mrf.mxu0
        %v2057 = vadd.f32 0.0, %v2056
        %v2058 = vpop.f32.mrf.mxu0
        %2059 = vmatprep.mubr.f32.mxu0 0.0
        %2060 = vmatmul.mubr.f32.gmra.mxu0 %v1674
        %v2061 = vpop.f32.mrf.mxu0
        %v2062 = vadd.f32 0.0, %v2061
        %v2063 = vpop.f32.mrf.mxu0
        %2064 = vdwg.mxu0
        %v2065 = vmul.f32 %v635, %v1747
        %v2066 = vmul.f32 %v640, %v1752
        %v2067 = vmul.f32 %v645, %v1757
        %v2068 = vmul.f32 %v650, %v1762
        %v2069 = vmul.f32 %v655, %v1767
        %v2070 = vmul.f32 %v660, %v1772
        %v2071 = vmul.f32 %v665, %v1777
        %v2072 = vmul.f32 %v670, %v1782
        %v2073 = vmul.f32 %v675, %v1787
        %v2074 = vmul.f32 %v680, %v1792
        %v2075 = vmul.f32 %v685, %v1797
        %v2076 = vmul.f32 %v690, %v1802
        %v2077 = vmul.f32 %v695, %v1807
        %v2078 = vmul.f32 %v700, %v1812
        %v2079 = vmul.f32 %v705, %v1817
        %v2080 = vmul.f32 %v710, %v1822
        %v2081 = vmul.f32 %v715, %v1827
        %v2082 = vmul.f32 %v720, %v1832
        %v2083 = vmul.f32 %v725, %v1837
        %v2084 = vmul.f32 %v730, %v1842
        %v2085 = vmul.f32 %v735, %v1847
        %v2086 = vmul.f32 %v740, %v1852
        %v2087 = vmul.f32 %v745, %v1857
        %v2088 = vmul.f32 %v750, %v1862
        %v2089 = vmul.f32 %v755, %v1867
        %v2090 = vmul.f32 %v760, %v1872
        %v2091 = vmul.f32 %v765, %v1877
        %v2092 = vmul.f32 %v770, %v1882
        %v2093 = vmul.f32 %v775, %v1887
        %v2094 = vmul.f32 %v780, %v1892
        %v2095 = vmul.f32 %v785, %v1897
        %v2096 = vmul.f32 %v790, %v1902
        %v2097 = vmul.f32 %v795, %v1907
        %v2098 = vmul.f32 %v800, %v1912
        %v2099 = vmul.f32 %v805, %v1917
        %v2100 = vmul.f32 %v810, %v1922
        %v2101 = vmul.f32 %v815, %v1927
        %v2102 = vmul.f32 %v820, %v1932
        %v2103 = vmul.f32 %v825, %v1937
        %v2104 = vmul.f32 %v830, %v1942
        %v2105 = vmul.f32 %v835, %v1947
        %v2106 = vmul.f32 %v840, %v1952
        %v2107 = vmul.f32 %v845, %v1957
        %v2108 = vmul.f32 %v850, %v1962
        %v2109 = vmul.f32 %v855, %v1967
        %v2110 = vmul.f32 %v860, %v1972
        %v2111 = vmul.f32 %v865, %v1977
        %v2112 = vmul.f32 %v870, %v1982
        %v2113 = vmul.f32 %v875, %v1987
        %v2114 = vmul.f32 %v880, %v1992
        %v2115 = vmul.f32 %v885, %v1997
        %v2116 = vmul.f32 %v890, %v2002
        %v2117 = vmul.f32 %v895, %v2007
        %v2118 = vmul.f32 %v900, %v2012
        %v2119 = vmul.f32 %v905, %v2017
        %v2120 = vmul.f32 %v910, %v2022
        %v2121 = vmul.f32 %v915, %v2027
        %v2122 = vmul.f32 %v920, %v2032
        %v2123 = vmul.f32 %v925, %v2037
        %v2124 = vmul.f32 %v930, %v2042
        %v2125 = vmul.f32 %v935, %v2047
        %v2126 = vmul.f32 %v940, %v2052
        %v2127 = vmul.f32 %v945, %v2057
        %v2128 = vmul.f32 %v950, %v2062
        %v2129 = vld [vmem:[#allocation7] sm:$0x1]
        %v2131 = vlaneseq
        %v2132 = vshrl.u32 %v2131, 7
        %v2133 = vsub.s32 0, %v2132
        %v2134 = vrot.slane %v2129, %v2133
        %v2136 = vadd.f32 %v2065, %v2134
        %v2137 = vadd.f32 %v2066, %v2134
        %v2138 = vadd.f32 %v2067, %v2134
        %v2139 = vadd.f32 %v2068, %v2134
        %v2140 = vadd.f32 %v2069, %v2134
        %v2141 = vadd.f32 %v2070, %v2134
        %v2142 = vadd.f32 %v2071, %v2134
        %v2143 = vadd.f32 %v2072, %v2134
        %v2144 = vadd.f32 %v2073, %v2134
        %v2145 = vadd.f32 %v2074, %v2134
        %v2146 = vadd.f32 %v2075, %v2134
        %v2147 = vadd.f32 %v2076, %v2134
        %v2148 = vadd.f32 %v2077, %v2134
        %v2149 = vadd.f32 %v2078, %v2134
        %v2150 = vadd.f32 %v2079, %v2134
        %v2151 = vadd.f32 %v2080, %v2134
        %v2152 = vadd.f32 %v2081, %v2134
        %v2153 = vadd.f32 %v2082, %v2134
        %v2154 = vadd.f32 %v2083, %v2134
        %v2155 = vadd.f32 %v2084, %v2134
        %v2156 = vadd.f32 %v2085, %v2134
        %v2157 = vadd.f32 %v2086, %v2134
        %v2158 = vadd.f32 %v2087, %v2134
        %v2159 = vadd.f32 %v2088, %v2134
        %v2160 = vadd.f32 %v2089, %v2134
        %v2161 = vadd.f32 %v2090, %v2134
        %v2162 = vadd.f32 %v2091, %v2134
        %v2163 = vadd.f32 %v2092, %v2134
        %v2164 = vadd.f32 %v2093, %v2134
        %v2165 = vadd.f32 %v2094, %v2134
        %v2166 = vadd.f32 %v2095, %v2134
        %v2167 = vadd.f32 %v2096, %v2134
        %v2168 = vadd.f32 %v2097, %v2134
        %v2169 = vadd.f32 %v2098, %v2134
        %v2170 = vadd.f32 %v2099, %v2134
        %v2171 = vadd.f32 %v2100, %v2134
        %v2172 = vadd.f32 %v2101, %v2134
        %v2173 = vadd.f32 %v2102, %v2134
        %v2174 = vadd.f32 %v2103, %v2134
        %v2175 = vadd.f32 %v2104, %v2134
        %v2176 = vadd.f32 %v2105, %v2134
        %v2177 = vadd.f32 %v2106, %v2134
        %v2178 = vadd.f32 %v2107, %v2134
        %v2179 = vadd.f32 %v2108, %v2134
        %v2180 = vadd.f32 %v2109, %v2134
        %v2181 = vadd.f32 %v2110, %v2134
        %v2182 = vadd.f32 %v2111, %v2134
        %v2183 = vadd.f32 %v2112, %v2134
        %v2184 = vadd.f32 %v2113, %v2134
        %v2185 = vadd.f32 %v2114, %v2134
        %v2186 = vadd.f32 %v2115, %v2134
        %v2187 = vadd.f32 %v2116, %v2134
        %v2188 = vadd.f32 %v2117, %v2134
        %v2189 = vadd.f32 %v2118, %v2134
        %v2190 = vadd.f32 %v2119, %v2134
        %v2191 = vadd.f32 %v2120, %v2134
        %v2192 = vadd.f32 %v2121, %v2134
        %v2193 = vadd.f32 %v2122, %v2134
        %v2194 = vadd.f32 %v2123, %v2134
        %v2195 = vadd.f32 %v2124, %v2134
        %v2196 = vadd.f32 %v2125, %v2134
        %v2197 = vadd.f32 %v2126, %v2134
        %v2198 = vadd.f32 %v2127, %v2134
        %v2199 = vadd.f32 %v2128, %v2134
        %2200 = vst [vmem:[%s298] sm:$0xff] %v2136
        %2201 = vst [vmem:[%s298 + $0x8] sm:$0xff] %v2137
        %2202 = vst [vmem:[%s298 + $0x10] sm:$0xff] %v2138
        %2203 = vst [vmem:[%s298 + $0x18] sm:$0xff] %v2139
        %2204 = vst [vmem:[%s298 + $0x20] sm:$0xff] %v2140
        %2205 = vst [vmem:[%s298 + $0x28] sm:$0xff] %v2141
        %2206 = vst [vmem:[%s298 + $0x30] sm:$0xff] %v2142
        %2207 = vst [vmem:[%s298 + $0x38] sm:$0xff] %v2143
        %2208 = vst [vmem:[%s298 + $0x40] sm:$0xff] %v2144
        %2209 = vst [vmem:[%s298 + $0x48] sm:$0xff] %v2145
        %2210 = vst [vmem:[%s298 + $0x50] sm:$0xff] %v2146
        %2211 = vst [vmem:[%s298 + $0x58] sm:$0xff] %v2147
        %2212 = vst [vmem:[%s298 + $0x60] sm:$0xff] %v2148
        %2213 = vst [vmem:[%s298 + $0x68] sm:$0xff] %v2149
        %2214 = vst [vmem:[%s298 + $0x70] sm:$0xff] %v2150
        %2215 = vst [vmem:[%s298 + $0x78] sm:$0xff] %v2151
        %2216 = vst [vmem:[%s298 + $0x80] sm:$0xff] %v2152
        %2217 = vst [vmem:[%s298 + $0x88] sm:$0xff] %v2153
        %2218 = vst [vmem:[%s298 + $0x90] sm:$0xff] %v2154
        %2219 = vst [vmem:[%s298 + $0x98] sm:$0xff] %v2155
        %2220 = vst [vmem:[%s298 + $0xa0] sm:$0xff] %v2156
        %2221 = vst [vmem:[%s298 + $0xa8] sm:$0xff] %v2157
        %2222 = vst [vmem:[%s298 + $0xb0] sm:$0xff] %v2158
        %2223 = vst [vmem:[%s298 + $0xb8] sm:$0xff] %v2159
        %2224 = vst [vmem:[%s298 + $0xc0] sm:$0xff] %v2160
        %2225 = vst [vmem:[%s298 + $0xc8] sm:$0xff] %v2161
        %2226 = vst [vmem:[%s298 + $0xd0] sm:$0xff] %v2162
        %2227 = vst [vmem:[%s298 + $0xd8] sm:$0xff] %v2163
        %2228 = vst [vmem:[%s298 + $0xe0] sm:$0xff] %v2164
        %2229 = vst [vmem:[%s298 + $0xe8] sm:$0xff] %v2165
        %2230 = vst [vmem:[%s298 + $0xf0] sm:$0xff] %v2166
        %2231 = vst [vmem:[%s298 + $0xf8] sm:$0xff] %v2167
        %2232 = vst [vmem:[%s298 + $0x100] sm:$0xff] %v2168
        %2233 = vst [vmem:[%s298 + $0x108] sm:$0xff] %v2169
        %2234 = vst [vmem:[%s298 + $0x110] sm:$0xff] %v2170
        %2235 = vst [vmem:[%s298 + $0x118] sm:$0xff] %v2171
        %2236 = vst [vmem:[%s298 + $0x120] sm:$0xff] %v2172
        %2237 = vst [vmem:[%s298 + $0x128] sm:$0xff] %v2173
        %2238 = vst [vmem:[%s298 + $0x130] sm:$0xff] %v2174
        %2239 = vst [vmem:[%s298 + $0x138] sm:$0xff] %v2175
        %2240 = vst [vmem:[%s298 + $0x140] sm:$0xff] %v2176
        %2241 = vst [vmem:[%s298 + $0x148] sm:$0xff] %v2177
        %2242 = vst [vmem:[%s298 + $0x150] sm:$0xff] %v2178
        %2243 = vst [vmem:[%s298 + $0x158] sm:$0xff] %v2179
        %2244 = vst [vmem:[%s298 + $0x160] sm:$0xff] %v2180
        %2245 = vst [vmem:[%s298 + $0x168] sm:$0xff] %v2181
        %2246 = vst [vmem:[%s298 + $0x170] sm:$0xff] %v2182
        %2247 = vst [vmem:[%s298 + $0x178] sm:$0xff] %v2183
        %2248 = vst [vmem:[%s298 + $0x180] sm:$0xff] %v2184
        %2249 = vst [vmem:[%s298 + $0x188] sm:$0xff] %v2185
        %2250 = vst [vmem:[%s298 + $0x190] sm:$0xff] %v2186
        %2251 = vst [vmem:[%s298 + $0x198] sm:$0xff] %v2187
        %2252 = vst [vmem:[%s298 + $0x1a0] sm:$0xff] %v2188
        %2253 = vst [vmem:[%s298 + $0x1a8] sm:$0xff] %v2189
        %2254 = vst [vmem:[%s298 + $0x1b0] sm:$0xff] %v2190
        %2255 = vst [vmem:[%s298 + $0x1b8] sm:$0xff] %v2191
        %2256 = vst [vmem:[%s298 + $0x1c0] sm:$0xff] %v2192
        %2257 = vst [vmem:[%s298 + $0x1c8] sm:$0xff] %v2193
        %2258 = vst [vmem:[%s298 + $0x1d0] sm:$0xff] %v2194
        %2259 = vst [vmem:[%s298 + $0x1d8] sm:$0xff] %v2195
        %2260 = vst [vmem:[%s298 + $0x1e0] sm:$0xff] %v2196
        %2261 = vst [vmem:[%s298 + $0x1e8] sm:$0xff] %v2197
        %2262 = vst [vmem:[%s298 + $0x1f0] sm:$0xff] %v2198
        %2263 = vst [vmem:[%s298 + $0x1f8] sm:$0xff] %v2199
        %s2264 = sand.u32 %s160, 1
        %s2265 = scalar_lea.sflag [#allocation4], %s2264
        %s2266 = sand.u32 %s160, 1
        %s2267 = smul.addr %s2266, 512
        %s2268 = scalar_lea.vmem [#allocation8], %s2267
        // Predicated region
        $region53: #{tpu_custom_call.1} parent=39 // pred_check
          %p2269 = pneg %p170
        $region54: #{tpu_custom_call.1} parent=39 // pred_check_branch
          %2271 = sbr.rel (%p2269) target = $region56
        $region55: #{tpu_custom_call.1} parent=39 // pred_region
          #allocation10 [shape = 'u32[6]{0}', space=smem, size = 0x18, scoped, tag = 'DMA stride descriptor']
          %s2272 = smul.u32 32, %s27
          %s2274 = ssub.s32 8192, 8192
          %2275 = vsyncadd %s2265, %s2274
          %s2276 = smul.addr %s28, 2
          %s2277 = smul.addr %s2272, 8
          %s2278 = sadd.s32 %s2276, %s2277
          %s2279 = smul.addr %s2278, 128
          %s2280 = scalar_lea.hbm %s5, %s2279
          %s2282 = sshll.u32 1, 14
          %s2283 = sxor.u32 4294967295, %s2282
          %s2286 = sshll.u32 7, 18
          %s2287 = sxor.u32 4294967295, %s2286
          %s2288 = sand.u32 0, %s2287
          %s2290 = sor.u32 %s2288, 0
          %s2291 = sshll.u32 %s2268, 4
          %s2292 = int_to_ptr.vmem [resolvable:$true] %s2291
          %2298 = sst [smem:[#allocation10]] 256
          %s2299 = scalar_lea.smem [#allocation10], 1
          %2300 = sst [smem:[%s2299]] 1024
          %s2301 = scalar_lea.smem [#allocation10], 2
          %2302 = sst [smem:[%s2301]] 2
          %s2303 = scalar_lea.smem [#allocation10], 3
          %2304 = sst [smem:[%s2303]] 128
          %s2305 = scalar_lea.smem [#allocation10], 4
          %2306 = sst [smem:[%s2305]] 128
          %s2307 = scalar_lea.smem [#allocation10], 5
          %2308 = sst [smem:[%s2307]] 8
          %2310 = dma.general %s2292, 8192, %s2280, %s2265, 131072, [#allocation10], %s2290, 0
        $region56: #{tpu_custom_call.1} parent=39 // pred_fallthru
          _
      $region40: #{tpu_custom_call.1} parent=5 // pred_fallthru
        _
      %p2311 = scmp.le.s32.totalorder 2, %s18
      // Predicated region
      $region57: #{tpu_custom_call.1} parent=5 // pred_check
        %p2312 = pneg %p2311
      $region58: #{tpu_custom_call.1} parent=5 // pred_check_branch
        %2314 = sbr.rel (%p2312) target = $region60
      $region59: #{tpu_custom_call.1} parent=5 // pred_region
        %s2315 = ssub.s32 %s18, 2
        // Predicated region
        $region61: #{tpu_custom_call.1} parent=59 // pred_check
          %p2316 = pneg %p176
        $region62: #{tpu_custom_call.1} parent=59 // pred_check_branch
          %2318 = sbr.rel (%p2316) target = $region64
        $region63: #{tpu_custom_call.1} parent=59 // pred_region
          %s2319 = sand.u32 %s161, 1
          %s2320 = scalar_lea.sflag [#allocation4], %s2319
          %s2321 = sand.u32 %s161, 1
          %s2322 = smul.addr %s2321, 512
          %s2323 = scalar_lea.vmem [#allocation8], %s2322
          %2324 = dma.done %s2320, 8192
        $region64: #{tpu_custom_call.1} parent=59 // pred_fallthru
          _
      $region60: #{tpu_custom_call.1} parent=5 // pred_fallthru
        _
    $region6: #{tpu_custom_call.1} parent=1 // loop_footer
      %s22 = sadd.s32 1, %s18
    $region7: #{tpu_custom_call.1} parent=1 // loop_footer_branch
      %17 = sbr.rel target = $region3
    $region8: #{tpu_custom_call.1} parent=1 // loop_exit
      _
    %2325 = vsyncpa [#allocation3], 1
    %s2326 = scalar_lea.sflag [#allocation3], 1
    %2327 = vsyncpa %s2326, 1
    %2328 = vsyncpa [#allocation6], 1
    %2329 = vsyncpa [#allocation4], 1
    %s2330 = scalar_lea.sflag [#allocation4], 1
    %2331 = vsyncpa %s2330, 1

</llo_original>
